<compile_context>
chip_gen: v7x
topology: tpu7x:2x2x1
jax: 0.10.0
libtpu: 0.0.40
codegen_flags: <defaults>
</compile_context>

<pallas_src>
import math

import jax
import jax.numpy as jnp
from jax.experimental import pallas as pl
from jax.experimental.pallas import tpu as pltpu


# ---------------------------------------------------------------------------
# Kernel: one (point-tile, batch) block of the 3-layer 1x1-conv MLP, transposed.
# ---------------------------------------------------------------------------
def _fold_kernel(feat_ref, pts_ref, w1g_ref, w2_ref, b2_ref, w3_ref, b3_ref, o_ref):
    # feat_ref: (1, H1, 1)  f32   per-batch  x @ W1_feat + b1  (column)
    # pts_ref:  (G, tile)   f32   batch-invariant grid-point tile
    # w1g_ref:  (H1, G)     f32   grid rows of W1, transposed  (resident)
    # w2_ref:   (H2, H1)    bf16  W2^T                          (resident)
    # b2_ref:   (H2, 1)     f32
    # w3_ref:   (D, H2)     bf16  W3^T                          (resident)
    # b3_ref:   (D, 1)      f32
    # o_ref:    (1, D, tile) f32
    #
    # Layer 1 rebuilt in-kernel (nothing (H1, N)-sized is read from HBM):
    # rank-G outer product on the VPU fused with the per-batch feature column,
    # bias, ReLU and the bf16 cast (single pass over the (H1, tile) tensor).
    h1 = feat_ref[0]                                          # (H1, 1)
    for d in range(pts_ref.shape[0]):                         # static unroll (G small)
        h1 = h1 + w1g_ref[:, d:d + 1] * pts_ref[d:d + 1, :]   # -> (H1, tile)
    h1 = jnp.maximum(h1, 0.0).astype(jnp.bfloat16)

    # Layer 2: 256x256 bf16 matmul on the MXU, f32 accumulation; bias/ReLU in f32.
    h2 = jnp.dot(w2_ref[...], h1, preferred_element_type=jnp.float32) + b2_ref[...]
    h2 = jnp.maximum(h2, 0.0).astype(jnp.bfloat16)            # (H2, tile)

    # Layer 3: tiny Dout-row projection, also bf16 on the MXU (single pass).
    o = jnp.dot(w3_ref[...], h2, preferred_element_type=jnp.float32) + b3_ref[...]
    o_ref[0] = o.astype(o_ref.dtype)                          # (D, tile) lane-dense


def _round_up(n, m):
    return ((n + m - 1) // m) * m


def _pallas_fold(feat_term, points, w1g_t, w2t, b2c, w3t, b3c, *, tile_n):
    """feat_term (B,H1,1), points (G,N_pad) -> (B, Dout, N_pad)."""
    B, H1, _ = feat_term.shape
    G, n_pad = points.shape
    H2 = w2t.shape[0]
    Dout = w3t.shape[0]
    assert n_pad % tile_n == 0
    nt = n_pad // tile_n

    return pl.pallas_call(
        _fold_kernel,
        out_shape=jax.ShapeDtypeStruct((B, Dout, n_pad), jnp.float32),
        grid_spec=pltpu.PrefetchScalarGridSpec(
            num_scalar_prefetch=0,
            # Point-tile axis OUTER, batch INNER: points/weights keep the same
            # block index across the inner batch sweep -> DMA'd once per tile;
            # only the tiny feat column is refetched per step.
            grid=(nt, B),
            in_specs=[
                pl.BlockSpec((1, H1, 1), lambda t, b: (b, 0, 0)),    # feat_term
                pl.BlockSpec((G, tile_n), lambda t, b: (0, t)),      # points tile
                pl.BlockSpec((H1, G), lambda t, b: (0, 0)),          # W1_grid^T
                pl.BlockSpec((H2, H1), lambda t, b: (0, 0)),         # W2^T (bf16)
                pl.BlockSpec((H2, 1), lambda t, b: (0, 0)),          # b2 column
                pl.BlockSpec((Dout, H2), lambda t, b: (0, 0)),       # W3^T (bf16)
                pl.BlockSpec((Dout, 1), lambda t, b: (0, 0)),        # b3 column
            ],
            out_specs=pl.BlockSpec((1, Dout, tile_n), lambda t, b: (b, 0, t)),
        ),
        compiler_params=pltpu.CompilerParams(
            dimension_semantics=("parallel", "parallel"),
            vmem_limit_bytes=32 * 1024 * 1024,
        ),
    )(feat_term, points, w1g_t, w2t, b2c, w3t, b3c)


# ---------------------------------------------------------------------------
# Host-side glue (constant grid, rank-1 layer-1 decomposition, N padding).
# ---------------------------------------------------------------------------
def build_grid_plane(num_points):
    """shape='plane': cartesian product of two linspace(0,1,n) axes, n=sqrt(num_points).

    Returns a single (2, n*n) constant; no per-batch broadcast needed.
    """
    n = int(math.sqrt(num_points))
    assert n * n == num_points, "plane grid requires num_points to be a perfect square"
    lin = jnp.linspace(0.0, 1.0, n)
    px = jnp.repeat(lin, n)                 # x varies slowest (itertools.product order)
    py = jnp.tile(lin, n)                   # y varies fastest
    return jnp.stack([px, py], axis=0).astype(jnp.float32)   # (2, N)


def fold_single_decoder_forward(x, params, num_points, *, max_tile=2048):
    """x: (B, 1, feat_dims) float32 -> (B, num_points, output_dim)."""
    assert max_tile % 128 == 0
    B, _, feat_dims = x.shape
    w1, b1, w2, b2, w3, b3 = params          # w1 (Cin,H1), w2 (H1,H2), w3 (H2,Dout)
    # TODO(synk): only shape='plane' grids are generated here; the other build_grid
    # variants are host-side constants and would slot into the same wrapper.
    points = build_grid_plane(num_points)    # (G, N) constant
    G, N = points.shape

    # Rank-1 split of layer 1 (tiny precompute, stays in XLA). The grid part of
    # layer 1 is rebuilt inside the kernel from the raw points tile.
    x_flat = x[:, 0, :]                                          # (B, feat)
    w1_feat = w1[:feat_dims]                                     # (feat, H1)
    w1_grid = w1[feat_dims:]                                     # (G, H1)
    feat_term = (x_flat @ w1_feat + b1[None, :])[..., None]      # (B, H1, 1)
    w1g_t = jnp.asarray(w1_grid.T, jnp.float32)                  # (H1, G)

    # Pad N up to a 128-aligned tile multiple -> lane-dense DMAs/stores, no
    # whole-N fallback for awkward N (e.g. 45^2 plane grids).
    tile_n = min(max_tile, _round_up(N, 128))
    n_pad = _round_up(N, tile_n)
    if n_pad != N:
        points = jnp.pad(points, ((0, 0), (0, n_pad - N)))

    w2t = w2.T.astype(jnp.bfloat16)                              # (H2, H1) bf16 for MXU
    b2c = b2[:, None]                                            # (H2, 1)
    w3t = w3.T.astype(jnp.bfloat16)                              # (Dout, H2) bf16
    b3c = b3[:, None]                                            # (Dout, 1)

    out_t = _pallas_fold(feat_term, points, w1g_t, w2t, b2c, w3t, b3c,
                         tile_n=tile_n)                          # (B, Dout, n_pad)
    return jnp.transpose(out_t[:, :, :N], (0, 2, 1))             # (B, N, Dout)


# ---------------------------------------------------------------------------
# Params + pure-JAX reference.
# ---------------------------------------------------------------------------
def init_params(key, feat_dims, grid_dim, output_dim, hidden=256):
    """Weights stored as (Cin, Cout) = torch conv weight[:, :, 0].T; biases 1-D."""
    cin = feat_dims + grid_dim
    ks = jax.random.split(key, 6)

    def u(k, shape, fan_in):
        bound = 1.0 / math.sqrt(fan_in)
        return jax.random.uniform(k, shape, jnp.float32, -bound, bound)

    w1 = u(ks[0], (cin, hidden), cin)
    b1 = u(ks[1], (hidden,), cin)
    w2 = u(ks[2], (hidden, hidden), hidden)
    b2 = u(ks[3], (hidden,), hidden)
    w3 = u(ks[4], (hidden, output_dim), hidden)
    b3 = u(ks[5], (output_dim,), hidden)
    return (w1, b1, w2, b2, w3, b3)


def reference_forward(x, params, num_points):
    """Pure-JAX f32 reference mirroring the PyTorch module exactly."""
    B, _, feat_dims = x.shape
    points = build_grid_plane(num_points)                        # (2, N)
    N = points.shape[1]
    x_rep = jnp.broadcast_to(jnp.transpose(x, (0, 2, 1)), (B, feat_dims, N))
    pts_b = jnp.broadcast_to(points[None], (B, 2, N))
    cat1 = jnp.concatenate([x_rep, pts_b], axis=1)               # (B, Cin, N)
    w1, b1, w2, b2, w3, b3 = params
    h = jnp.einsum("bcn,ch->bhn", cat1, w1) + b1[None, :, None]
    h = jnp.maximum(h, 0.0)
    h = jnp.einsum("bcn,ch->bhn", h, w2) + b2[None, :, None]
    h = jnp.maximum(h, 0.0)
    o = jnp.einsum("bcn,ch->bhn", h, w3) + b3[None, :, None]
    return jnp.transpose(o, (0, 2, 1))                           # (B, N, out_dim)


if __name__ == "__main__":
    # args: shape='plane' (grid_dim=2), dataset without '3d' (output_dim=2),
    # feat_dims=32, num_points=16 (4x4 plane grid), batch=2.
    B, feat_dims, num_points = 2, 32, 16
    grid_dim, output_dim = 2, 2

    key = jax.random.PRNGKey(0)
    kx, kp = jax.random.split(key)
    x = jax.random.normal(kx, (B, 1, feat_dims), dtype=jnp.float32)
    params = init_params(kp, feat_dims, grid_dim, output_dim)

    out = fold_single_decoder_forward(x, params, num_points)
    out = jax.block_until_ready(out)

    ref = reference_forward(x, params, num_points)
    assert out.shape == (B, num_points, output_dim)
    # Layers 2 and 3 run in bf16 on the MXU -> relaxed tolerance vs the f32 reference.
    assert jnp.allclose(out, ref, atol=1e-2, rtol=1e-2), float(jnp.max(jnp.abs(out - ref)))

    print("KERNEL_OK")
</pallas_src>

<mosaic_0001>
module attributes {stable_mosaic.version = 11 : i64} {
  func.func @_fold_kernel(%arg0: i32, %arg1: i32, %arg2: memref<1x256x1xf32, #tpu.memory_space<vmem>>, %arg3: memref<2x128xf32, #tpu.memory_space<vmem>>, %arg4: memref<256x2xf32, #tpu.memory_space<vmem>>, %arg5: memref<256x256xbf16, #tpu.memory_space<vmem>>, %arg6: memref<256x1xf32, #tpu.memory_space<vmem>>, %arg7: memref<2x256xbf16, #tpu.memory_space<vmem>>, %arg8: memref<2x1xf32, #tpu.memory_space<vmem>>, %arg9: memref<1x2x128xf32, #tpu.memory_space<vmem>>) attributes {dimension_semantics = [#tpu.dimension_semantics<parallel>, #tpu.dimension_semantics<parallel>], iteration_bounds = array<i64: 1, 2>, scalar_prefetch = 0 : i64, scratch_operands = 0 : i64, tpu.core_type = #tpu.core_type<tc>, window_params = [{transform_indices = @transform_0, window_bounds = array<i64: 1, 256, 1>}, {transform_indices = @transform_1, window_bounds = array<i64: 2, 128>}, {pipeline_mode = #tpu.pipeline_mode<synchronous>, transform_indices = @transform_2, window_bounds = array<i64: 256, 2>}, {pipeline_mode = #tpu.pipeline_mode<synchronous>, transform_indices = @transform_3, window_bounds = array<i64: 256, 256>}, {pipeline_mode = #tpu.pipeline_mode<synchronous>, transform_indices = @transform_4, window_bounds = array<i64: 256, 1>}, {pipeline_mode = #tpu.pipeline_mode<synchronous>, transform_indices = @transform_5, window_bounds = array<i64: 2, 256>}, {pipeline_mode = #tpu.pipeline_mode<synchronous>, transform_indices = @transform_6, window_bounds = array<i64: 2, 1>}, {transform_indices = @transform_7, window_bounds = array<i64: 1, 2, 128>}]} {
    %c0 = arith.constant 0 : index
    %c0_0 = arith.constant 0 : index
    %c0_1 = arith.constant 0 : index
    %0 = vector.load %arg2[%c0, %c0_0, %c0_1] : memref<1x256x1xf32, #tpu.memory_space<vmem>>, vector<1x256x1xf32>
    %1 = vector.shape_cast %0 : vector<1x256x1xf32> to vector<256x1xf32>
    %c0_2 = arith.constant 0 : index
    %c0_3 = arith.constant 0 : index
    %2 = vector.load %arg4[%c0_2, %c0_3] : memref<256x2xf32, #tpu.memory_space<vmem>>, vector<256x1xf32>
    %c0_4 = arith.constant 0 : index
    %c0_5 = arith.constant 0 : index
    %3 = vector.load %arg3[%c0_4, %c0_5] : memref<2x128xf32, #tpu.memory_space<vmem>>, vector<1x128xf32>
    %4 = vector.broadcast %2 : vector<256x1xf32> to vector<256x128xf32>
    %5 = vector.broadcast %3 : vector<1x128xf32> to vector<256x128xf32>
    %6 = arith.mulf %4, %5 : vector<256x128xf32>
    %7 = vector.broadcast %1 : vector<256x1xf32> to vector<256x128xf32>
    %8 = arith.addf %7, %6 : vector<256x128xf32>
    %c0_6 = arith.constant 0 : index
    %c1 = arith.constant 1 : index
    %9 = vector.load %arg4[%c0_6, %c1] : memref<256x2xf32, #tpu.memory_space<vmem>>, vector<256x1xf32>
    %c1_7 = arith.constant 1 : index
    %c0_8 = arith.constant 0 : index
    %10 = vector.load %arg3[%c1_7, %c0_8] : memref<2x128xf32, #tpu.memory_space<vmem>>, vector<1x128xf32>
    %11 = vector.broadcast %9 : vector<256x1xf32> to vector<256x128xf32>
    %12 = vector.broadcast %10 : vector<1x128xf32> to vector<256x128xf32>
    %13 = arith.mulf %11, %12 : vector<256x128xf32>
    %14 = arith.addf %8, %13 : vector<256x128xf32>
    %cst = arith.constant 0.000000e+00 : f32
    %15 = vector.broadcast %cst : f32 to vector<256x128xf32>
    %16 = arith.maximumf %14, %15 : vector<256x128xf32>
    %17 = arith.truncf %16 : vector<256x128xf32> to vector<256x128xbf16>
    %c0_9 = arith.constant 0 : index
    %c0_10 = arith.constant 0 : index
    %18 = vector.load %arg5[%c0_9, %c0_10] : memref<256x256xbf16, #tpu.memory_space<vmem>>, vector<256x256xbf16>
    %cst_11 = arith.constant dense<0.000000e+00> : vector<256x128xf32>
    %19 = tpu.matmul %18, %17, %cst_11 {dimension_numbers = #tpu.dot_dimension_numbers<[1], [0], [0], [1], [0, 0, 1, 1], [], []>} : vector<256x256xbf16>, vector<256x128xbf16>, vector<256x128xf32> -> vector<256x128xf32>
    %c0_12 = arith.constant 0 : index
    %c0_13 = arith.constant 0 : index
    %20 = vector.load %arg6[%c0_12, %c0_13] : memref<256x1xf32, #tpu.memory_space<vmem>>, vector<256x1xf32>
    %21 = vector.broadcast %20 : vector<256x1xf32> to vector<256x128xf32>
    %22 = arith.addf %19, %21 : vector<256x128xf32>
    %cst_14 = arith.constant 0.000000e+00 : f32
    %23 = vector.broadcast %cst_14 : f32 to vector<256x128xf32>
    %24 = arith.maximumf %22, %23 : vector<256x128xf32>
    %25 = arith.truncf %24 : vector<256x128xf32> to vector<256x128xbf16>
    %c0_15 = arith.constant 0 : index
    %c0_16 = arith.constant 0 : index
    %26 = vector.load %arg7[%c0_15, %c0_16] : memref<2x256xbf16, #tpu.memory_space<vmem>>, vector<2x256xbf16>
    %cst_17 = arith.constant dense<0.000000e+00> : vector<2x128xf32>
    %27 = tpu.matmul %26, %25, %cst_17 {dimension_numbers = #tpu.dot_dimension_numbers<[1], [0], [0], [1], [0, 0, 1, 1], [], []>} : vector<2x256xbf16>, vector<256x128xbf16>, vector<2x128xf32> -> vector<2x128xf32>
    %c0_18 = arith.constant 0 : index
    %c0_19 = arith.constant 0 : index
    %28 = vector.load %arg8[%c0_18, %c0_19] : memref<2x1xf32, #tpu.memory_space<vmem>>, vector<2x1xf32>
    %29 = vector.broadcast %28 : vector<2x1xf32> to vector<2x128xf32>
    %30 = arith.addf %27, %29 : vector<2x128xf32>
    %c0_20 = arith.constant 0 : index
    %c0_21 = arith.constant 0 : index
    %c0_22 = arith.constant 0 : index
    %31 = vector.load %arg9[%c0_20, %c0_21, %c0_22] : memref<1x2x128xf32, #tpu.memory_space<vmem>>, vector<1x2x128xf32>
    %32 = vector.shape_cast %31 : vector<1x2x128xf32> to vector<2x128xf32>
    %33 = vector.shape_cast %30 : vector<2x128xf32> to vector<1x2x128xf32>
    tpu.vector_store %arg9[%c0_20, %c0_21, %c0_22], %33 {strides = array<i32>} : memref<1x2x128xf32, #tpu.memory_space<vmem>>, vector<1x2x128xf32>,
    return
  }
  func.func @transform_0(%arg0: i32, %arg1: i32) -> (i32, i32, i32) {
    %c0_i32 = arith.constant 0 : i32
    %c0_i32_0 = arith.constant 0 : i32
    %c0_i32_1 = arith.constant 0 : i32
    return %arg1, %c0_i32, %c0_i32_0 : i32, i32, i32
  }
  func.func @transform_1(%arg0: i32, %arg1: i32) -> (i32, i32) {
    %c0_i32 = arith.constant 0 : i32
    %c0_i32_0 = arith.constant 0 : i32
    return %c0_i32, %arg0 : i32, i32
  }
  func.func @transform_2(%arg0: i32, %arg1: i32) -> (i32, i32) {
    %c0_i32 = arith.constant 0 : i32
    %c0_i32_0 = arith.constant 0 : i32
    %c0_i32_1 = arith.constant 0 : i32
    return %c0_i32, %c0_i32_0 : i32, i32
  }
  func.func @transform_3(%arg0: i32, %arg1: i32) -> (i32, i32) {
    %c0_i32 = arith.constant 0 : i32
    %c0_i32_0 = arith.constant 0 : i32
    %c0_i32_1 = arith.constant 0 : i32
    return %c0_i32, %c0_i32_0 : i32, i32
  }
  func.func @transform_4(%arg0: i32, %arg1: i32) -> (i32, i32) {
    %c0_i32 = arith.constant 0 : i32
    %c0_i32_0 = arith.constant 0 : i32
    %c0_i32_1 = arith.constant 0 : i32
    return %c0_i32, %c0_i32_0 : i32, i32
  }
  func.func @transform_5(%arg0: i32, %arg1: i32) -> (i32, i32) {
    %c0_i32 = arith.constant 0 : i32
    %c0_i32_0 = arith.constant 0 : i32
    %c0_i32_1 = arith.constant 0 : i32
    return %c0_i32, %c0_i32_0 : i32, i32
  }
  func.func @transform_6(%arg0: i32, %arg1: i32) -> (i32, i32) {
    %c0_i32 = arith.constant 0 : i32
    %c0_i32_0 = arith.constant 0 : i32
    %c0_i32_1 = arith.constant 0 : i32
    return %c0_i32, %c0_i32_0 : i32, i32
  }
  func.func @transform_7(%arg0: i32, %arg1: i32) -> (i32, i32, i32) {
    %c0_i32 = arith.constant 0 : i32
    %c0_i32_0 = arith.constant 0 : i32
    return %arg1, %c0_i32, %arg0 : i32, i32, i32
  }
}

</mosaic_0001>

<llo_original>
// kernel: tpu_custom_call.1
$region0: #{tpu_custom_call.1}
  #allocation0 [shape = 'u32[]', space=smem, size = 0x4, offset = 0x4, fixed_abs, tag = 'smem constant byte address 0x4 - core index']
  #allocation1 [shape = 'u32[144,128]{1,0:T(1,128)}', space=vmem, size = 0x12000, scoped, tag = 'internal scratch']
  %s0 = inlined_call_operand.vmem [shape: f32[2,256,1], index: 0, kind: input, shape index: {}]
  %s1 = inlined_call_operand.vmem [shape: f32[2,128], index: 1, kind: input, shape index: {}]
  %s2 = inlined_call_operand.vmem [shape: f32[256,2], index: 2, kind: input, shape index: {}]
  %s3 = inlined_call_operand.vmem [shape: bf16[256,256], index: 3, kind: input, shape index: {}]
  %s4 = inlined_call_operand.vmem [shape: f32[256,1], index: 4, kind: input, shape index: {}]
  %s5 = inlined_call_operand.vmem [shape: bf16[2,256], index: 5, kind: input, shape index: {}]
  %s6 = inlined_call_operand.vmem [shape: f32[2,1], index: 6, kind: input, shape index: {}]
  %s7 = inlined_call_operand.hbm [shape: f32[2,2,128], index: 7, kind: output, shape index: {}]
  %s8 = sld [smem:[#allocation0]]
  $region61: #{tpu_custom_call.1} parent=0
    _
  %s10 = ssub.s32 1, %s8
  %s11 = scalar_select 0, %s10, %s8
  $region1: #{tpu_custom_call.1} parent=0
    #allocation2 [shape = 'u8[2048]{0}', space=vmem, size = 0x800, scoped, tag = 'output window, operand 0']
    #allocation3 [shape = 's32[2]{0}', space=sflag, size = 0x8, scoped, tag = 'scoped memory for tpu_custom_call.1']
    %12 = vsyncpa [#allocation3], 0
    %s13 = scalar_lea.sflag [#allocation3], 1
    %14 = vsyncpa %s13, 0
    loop: start=0, step=1, limit=4
    $region2: #{tpu_custom_call.1} parent=1 // loop_pre_header
      _
    $region3: #{tpu_custom_call.1} parent=1 // loop_header
      %s16 = sphi 0, %s20
      %p17 = scmp.ge.s32.totalorder %s16, 4
      %s23 = sphi 0, %s35
      %s24 = sphi 0, %s31
      %s25 = sphi 0, %s23
      %s26 = sphi 0, %s24
      %s27 = sphi 0, %s25
      %s28 = sphi 0, %s26
      %s38 = sphi 0, %s40
      %s41 = sphi 0, %s38
      %s42 = sphi 0, %s41
      %s58 = sphi 0, %s42
      %s64 = sphi 0, %s66
      %s67 = sphi 0, %s64
      %s68 = sphi 0, %s67
      %s84 = sphi 0, %s68
      %s88 = sphi 0, %s88
      %s90 = sphi 0, %s88
      %s91 = sphi 0, %s90
      %s105 = sphi 0, %s91
      %s109 = sphi 0, %s109
      %s111 = sphi 0, %s109
      %s112 = sphi 0, %s111
      %s126 = sphi 0, %s112
      %s130 = sphi 0, %s130
      %s132 = sphi 0, %s130
      %s133 = sphi 0, %s132
      %s147 = sphi 0, %s133
      %s151 = sphi 0, %s151
      %s153 = sphi 0, %s151
      %s154 = sphi 0, %s153
      %s168 = sphi 0, %s154
      %s172 = sphi 0, %s172
      %s174 = sphi 0, %s172
      %s175 = sphi 0, %s174
      %s189 = sphi 0, %s175
      %s197 = sphi 0, %s199
      %s200 = sphi 0, %s197
      %s201 = sphi 0, %s200
      %s217 = sphi 0, %s201
    $region4: #{tpu_custom_call.1} parent=1 // loop_header_branch
      %19 = sbr.rel (%p17) target = $region8
    $region5: #{tpu_custom_call.1} parent=1 // loop_body
      %s21 = ssub.s32 %s16, 1
      %s22 = ssub.s32 %s16, 2
      %s29 = sadd.s32 1, %s24
      %p30 = scmp.ge.s32.totalorder %s29, 2
      %s31 = scalar_select %p30, 0, %s29
      %s32 = sadd.s32 1, %s23
      %s33 = scalar_select %p30, %s32, %s23
      %p34 = scmp.ge.s32.totalorder %s33, 1
      %s35 = scalar_select %p34, 0, %s33
      %s36 = ssub.s32 %s24, %s31
      %p37 = scmp.eq.s32.totalorder %s36, 0
      %s39 = sadd.s32 %s38, 1
      %s40 = scalar_select %p37, %s38, %s39
      %p43 = pneg %p37
      %p44 = scmp.eq.s32.totalorder %s16, 1
      %p45 = por %p43, %p44
      %p46 = scmp.ne.s32.totalorder %s38, %s41
      %p47 = scmp.eq.s32.totalorder %s16, 0
      %p48 = por %p46, %p47
      %p49 = scmp.ne.s32.totalorder %s38, %s41
      %p50 = scmp.eq.s32.totalorder %s21, 1
      %p51 = por %p49, %p50
      %p52 = scmp.ne.s32.totalorder %s41, %s42
      %p53 = scmp.eq.s32.totalorder %s21, 0
      %p54 = por %p52, %p53
      %p55 = scmp.ne.s32.totalorder %s41, %s42
      %p56 = scmp.eq.s32.totalorder %s22, 1
      %p57 = por %p55, %p56
      %p59 = scmp.ne.s32.totalorder %s42, %s58
      %p60 = scmp.eq.s32.totalorder %s22, 0
      %p61 = por %p59, %p60
      %s62 = ssub.s32 %s23, %s35
      %p63 = scmp.eq.s32.totalorder %s62, 0
      %s65 = sadd.s32 %s64, 1
      %s66 = scalar_select %p63, %s64, %s65
      %p69 = pneg %p63
      %p70 = scmp.eq.s32.totalorder %s16, 1
      %p71 = por %p69, %p70
      %p72 = scmp.ne.s32.totalorder %s64, %s67
      %p73 = scmp.eq.s32.totalorder %s16, 0
      %p74 = por %p72, %p73
      %p75 = scmp.ne.s32.totalorder %s64, %s67
      %p76 = scmp.eq.s32.totalorder %s21, 1
      %p77 = por %p75, %p76
      %p78 = scmp.ne.s32.totalorder %s67, %s68
      %p79 = scmp.eq.s32.totalorder %s21, 0
      %p80 = por %p78, %p79
      %p81 = scmp.ne.s32.totalorder %s67, %s68
      %p82 = scmp.eq.s32.totalorder %s22, 1
      %p83 = por %p81, %p82
      %p85 = scmp.ne.s32.totalorder %s68, %s84
      %p86 = scmp.eq.s32.totalorder %s22, 0
      %p87 = por %p85, %p86
      %s89 = sadd.s32 %s88, 1
      %p92 = scmp.eq.s32.totalorder %s16, 1
      %p93 = scmp.ne.s32.totalorder %s88, %s90
      %p94 = scmp.eq.s32.totalorder %s16, 0
      %p95 = por %p93, %p94
      %p96 = scmp.ne.s32.totalorder %s88, %s90
      %p97 = scmp.eq.s32.totalorder %s21, 1
      %p98 = por %p96, %p97
      %p99 = scmp.ne.s32.totalorder %s90, %s91
      %p100 = scmp.eq.s32.totalorder %s21, 0
      %p101 = por %p99, %p100
      %p102 = scmp.ne.s32.totalorder %s90, %s91
      %p103 = scmp.eq.s32.totalorder %s22, 1
      %p104 = por %p102, %p103
      %p106 = scmp.ne.s32.totalorder %s91, %s105
      %p107 = scmp.eq.s32.totalorder %s22, 0
      %p108 = por %p106, %p107
      %s110 = sadd.s32 %s109, 1
      %p113 = scmp.eq.s32.totalorder %s16, 1
      %p114 = scmp.ne.s32.totalorder %s109, %s111
      %p115 = scmp.eq.s32.totalorder %s16, 0
      %p116 = por %p114, %p115
      %p117 = scmp.ne.s32.totalorder %s109, %s111
      %p118 = scmp.eq.s32.totalorder %s21, 1
      %p119 = por %p117, %p118
      %p120 = scmp.ne.s32.totalorder %s111, %s112
      %p121 = scmp.eq.s32.totalorder %s21, 0
      %p122 = por %p120, %p121
      %p123 = scmp.ne.s32.totalorder %s111, %s112
      %p124 = scmp.eq.s32.totalorder %s22, 1
      %p125 = por %p123, %p124
      %p127 = scmp.ne.s32.totalorder %s112, %s126
      %p128 = scmp.eq.s32.totalorder %s22, 0
      %p129 = por %p127, %p128
      %s131 = sadd.s32 %s130, 1
      %p134 = scmp.eq.s32.totalorder %s16, 1
      %p135 = scmp.ne.s32.totalorder %s130, %s132
      %p136 = scmp.eq.s32.totalorder %s16, 0
      %p137 = por %p135, %p136
      %p138 = scmp.ne.s32.totalorder %s130, %s132
      %p139 = scmp.eq.s32.totalorder %s21, 1
      %p140 = por %p138, %p139
      %p141 = scmp.ne.s32.totalorder %s132, %s133
      %p142 = scmp.eq.s32.totalorder %s21, 0
      %p143 = por %p141, %p142
      %p144 = scmp.ne.s32.totalorder %s132, %s133
      %p145 = scmp.eq.s32.totalorder %s22, 1
      %p146 = por %p144, %p145
      %p148 = scmp.ne.s32.totalorder %s133, %s147
      %p149 = scmp.eq.s32.totalorder %s22, 0
      %p150 = por %p148, %p149
      %s152 = sadd.s32 %s151, 1
      %p155 = scmp.eq.s32.totalorder %s16, 1
      %p156 = scmp.ne.s32.totalorder %s151, %s153
      %p157 = scmp.eq.s32.totalorder %s16, 0
      %p158 = por %p156, %p157
      %p159 = scmp.ne.s32.totalorder %s151, %s153
      %p160 = scmp.eq.s32.totalorder %s21, 1
      %p161 = por %p159, %p160
      %p162 = scmp.ne.s32.totalorder %s153, %s154
      %p163 = scmp.eq.s32.totalorder %s21, 0
      %p164 = por %p162, %p163
      %p165 = scmp.ne.s32.totalorder %s153, %s154
      %p166 = scmp.eq.s32.totalorder %s22, 1
      %p167 = por %p165, %p166
      %p169 = scmp.ne.s32.totalorder %s154, %s168
      %p170 = scmp.eq.s32.totalorder %s22, 0
      %p171 = por %p169, %p170
      %s173 = sadd.s32 %s172, 1
      %p176 = scmp.eq.s32.totalorder %s16, 1
      %p177 = scmp.ne.s32.totalorder %s172, %s174
      %p178 = scmp.eq.s32.totalorder %s16, 0
      %p179 = por %p177, %p178
      %p180 = scmp.ne.s32.totalorder %s172, %s174
      %p181 = scmp.eq.s32.totalorder %s21, 1
      %p182 = por %p180, %p181
      %p183 = scmp.ne.s32.totalorder %s174, %s175
      %p184 = scmp.eq.s32.totalorder %s21, 0
      %p185 = por %p183, %p184
      %p186 = scmp.ne.s32.totalorder %s174, %s175
      %p187 = scmp.eq.s32.totalorder %s22, 1
      %p188 = por %p186, %p187
      %p190 = scmp.ne.s32.totalorder %s175, %s189
      %p191 = scmp.eq.s32.totalorder %s22, 0
      %p192 = por %p190, %p191
      %s193 = ssub.s32 %s24, %s31
      %s194 = ssub.s32 %s23, %s35
      %s195 = sor.u32 %s193, %s194
      %p196 = scmp.eq.s32.totalorder %s195, 0
      %s198 = sadd.s32 %s197, 1
      %s199 = scalar_select %p196, %s197, %s198
      %p202 = pneg %p196
      %p203 = scmp.eq.s32.totalorder %s16, 1
      %p204 = por %p202, %p203
      %p205 = scmp.ne.s32.totalorder %s197, %s200
      %p206 = scmp.eq.s32.totalorder %s16, 0
      %p207 = por %p205, %p206
      %p208 = scmp.ne.s32.totalorder %s197, %s200
      %p209 = scmp.eq.s32.totalorder %s21, 1
      %p210 = por %p208, %p209
      %p211 = scmp.ne.s32.totalorder %s200, %s201
      %p212 = scmp.eq.s32.totalorder %s21, 0
      %p213 = por %p211, %p212
      %p214 = scmp.ne.s32.totalorder %s200, %s201
      %p215 = scmp.eq.s32.totalorder %s22, 1
      %p216 = por %p214, %p215
      %p218 = scmp.ne.s32.totalorder %s201, %s217
      %p219 = scmp.eq.s32.totalorder %s22, 0
      %p220 = por %p218, %p219
      %p221 = scmp.le.s32.totalorder 1, %s16
      %p222 = scmp.lt.s32.totalorder %s16, 3
      %p223 = pnand %p221, %p222
      %p224 = pneg %p223
      // Predicated region
      $region9: #{tpu_custom_call.1} parent=5 // pred_check
        _
      $region10: #{tpu_custom_call.1} parent=5 // pred_check_branch
        %226 = sbr.rel (%p223) target = $region12
      $region11: #{tpu_custom_call.1} parent=5 // pred_region
        %s227 = ssub.s32 %s16, 1
        // Predicated region
        $region13: #{tpu_custom_call.1} parent=11 // pred_check
          %p228 = pneg %p80
        $region14: #{tpu_custom_call.1} parent=11 // pred_check_branch
          %230 = sbr.rel (%p228) target = $region16
        $region15: #{tpu_custom_call.1} parent=11 // pred_region
          %p231 = scmp.lt.s32.totalorder %s25, 0
          %s232 = scalar_select %p231, %s25, 0
          %s233 = smul.addr %s232, 2
          %s234 = scalar_lea.vmem %s1, %s233
        $region16: #{tpu_custom_call.1} parent=11 // pred_fallthru
          _
        // Predicated region
        $region17: #{tpu_custom_call.1} parent=11 // pred_check
          %p235 = pneg %p101
        $region18: #{tpu_custom_call.1} parent=11 // pred_check_branch
          %237 = sbr.rel (%p235) target = $region20
        $region19: #{tpu_custom_call.1} parent=11 // pred_region
          _
        $region20: #{tpu_custom_call.1} parent=11 // pred_fallthru
          _
        // Predicated region
        $region21: #{tpu_custom_call.1} parent=11 // pred_check
          %p238 = pneg %p122
        $region22: #{tpu_custom_call.1} parent=11 // pred_check_branch
          %240 = sbr.rel (%p238) target = $region24
        $region23: #{tpu_custom_call.1} parent=11 // pred_region
          _
        $region24: #{tpu_custom_call.1} parent=11 // pred_fallthru
          _
        // Predicated region
        $region25: #{tpu_custom_call.1} parent=11 // pred_check
          %p241 = pneg %p143
        $region26: #{tpu_custom_call.1} parent=11 // pred_check_branch
          %243 = sbr.rel (%p241) target = $region28
        $region27: #{tpu_custom_call.1} parent=11 // pred_region
          _
        $region28: #{tpu_custom_call.1} parent=11 // pred_fallthru
          _
        // Predicated region
        $region29: #{tpu_custom_call.1} parent=11 // pred_check
          %p244 = pneg %p164
        $region30: #{tpu_custom_call.1} parent=11 // pred_check_branch
          %246 = sbr.rel (%p244) target = $region32
        $region31: #{tpu_custom_call.1} parent=11 // pred_region
          _
        $region32: #{tpu_custom_call.1} parent=11 // pred_fallthru
          _
        // Predicated region
        $region33: #{tpu_custom_call.1} parent=11 // pred_check
          %p247 = pneg %p185
        $region34: #{tpu_custom_call.1} parent=11 // pred_check_branch
          %249 = sbr.rel (%p247) target = $region36
        $region35: #{tpu_custom_call.1} parent=11 // pred_region
          _
        $region36: #{tpu_custom_call.1} parent=11 // pred_fallthru
          _
      $region12: #{tpu_custom_call.1} parent=5 // pred_fallthru
        _
      %p250 = scmp.lt.s32.totalorder %s16, 2
      // Predicated region
      $region37: #{tpu_custom_call.1} parent=5 // pred_check
        %p251 = pneg %p250
      $region38: #{tpu_custom_call.1} parent=5 // pred_check_branch
        %253 = sbr.rel (%p251) target = $region40
      $region39: #{tpu_custom_call.1} parent=5 // pred_region
        // Predicated region
        $region41: #{tpu_custom_call.1} parent=39 // pred_check
          %p254 = pneg %p48
        $region42: #{tpu_custom_call.1} parent=39 // pred_check_branch
          %256 = sbr.rel (%p254) target = $region44
        $region43: #{tpu_custom_call.1} parent=39 // pred_region
          %p257 = scmp.lt.s32.totalorder %s24, 1
          %s258 = scalar_select %p257, %s24, 1
          %s259 = smul.addr %s258, 32
          %s260 = smul.addr %s259, 8
          %s261 = scalar_lea.vmem %s0, %s260
        $region44: #{tpu_custom_call.1} parent=39 // pred_fallthru
          _
      $region40: #{tpu_custom_call.1} parent=5 // pred_fallthru
        _
      %p262 = scmp.le.s32.totalorder 1, %s16
      %p263 = scmp.lt.s32.totalorder %s16, 3
      %p264 = pnand %p262, %p263
      %p265 = pneg %p264
      // Predicated region
      $region45: #{tpu_custom_call.1} parent=5 // pred_check
        _
      $region46: #{tpu_custom_call.1} parent=5 // pred_check_branch
        %267 = sbr.rel (%p264) target = $region48
      $region47: #{tpu_custom_call.1} parent=5 // pred_region
        %s268 = ssub.s32 %s16, 1
        %p269 = scmp.lt.s32.totalorder %s26, 1
        %s270 = scalar_select %p269, %s26, 1
        %s271 = smul.addr %s270, 32
        %s272 = smul.addr %s271, 8
        %s273 = scalar_lea.vmem %s0, %s272
        %p274 = pneg %p54
        %p275 = pneg %p51
        %p276 = scmp.lt.s32.totalorder %s25, 0
        %s277 = scalar_select %p276, %s25, 0
        %s278 = smul.addr %s277, 2
        %s279 = scalar_lea.vmem %s1, %s278
        %p280 = pneg %p80
        %p281 = pneg %p77
        %p282 = pneg %p101
        %p283 = pneg %p98
        %p284 = pneg %p122
        %p285 = pneg %p119
        %p286 = pneg %p143
        %p287 = pneg %p140
        %p288 = pneg %p164
        %p289 = pneg %p161
        %p290 = pneg %p185
        %p291 = pneg %p182
        %p292 = pneg %p213
        %p293 = pneg %p210
        %s294 = sand.u32 %s200, 1
        %s295 = scalar_lea.sflag [#allocation3], %s294
        %s296 = sand.u32 %s200, 1
        %s297 = smul.addr %s296, 2
        %s298 = scalar_lea.vmem [#allocation2], %s297
        %p299 = scmp.lt.s32.totalorder %s26, 1
        %s300 = scalar_select %p299, %s26, 1
        %s301 = smul.addr %s300, 32
        %s302 = smul.addr %s301, 8
        %s303 = scalar_lea.vmem %s0, %s302
        %p304 = scmp.lt.s32.totalorder %s25, 0
        %s305 = scalar_select %p304, %s25, 0
        %s306 = smul.addr %s305, 2
        %s307 = scalar_lea.vmem %s1, %s306
        %v309 = vld [vmem:[%s303] sm:$0xff]
        %v310 = vld [vmem:[%s303 + $0x8] sm:$0xff]
        %v311 = vld [vmem:[%s303 + $0x10] sm:$0xff]
        %v312 = vld [vmem:[%s303 + $0x18] sm:$0xff]
        %v313 = vld [vmem:[%s303 + $0x20] sm:$0xff]
        %v314 = vld [vmem:[%s303 + $0x28] sm:$0xff]
        %v315 = vld [vmem:[%s303 + $0x30] sm:$0xff]
        %v316 = vld [vmem:[%s303 + $0x38] sm:$0xff]
        %v317 = vld [vmem:[%s303 + $0x40] sm:$0xff]
        %v318 = vld [vmem:[%s303 + $0x48] sm:$0xff]
        %v319 = vld [vmem:[%s303 + $0x50] sm:$0xff]
        %v320 = vld [vmem:[%s303 + $0x58] sm:$0xff]
        %v321 = vld [vmem:[%s303 + $0x60] sm:$0xff]
        %v322 = vld [vmem:[%s303 + $0x68] sm:$0xff]
        %v323 = vld [vmem:[%s303 + $0x70] sm:$0xff]
        %v324 = vld [vmem:[%s303 + $0x78] sm:$0xff]
        %v325 = vld [vmem:[%s303 + $0x80] sm:$0xff]
        %v326 = vld [vmem:[%s303 + $0x88] sm:$0xff]
        %v327 = vld [vmem:[%s303 + $0x90] sm:$0xff]
        %v328 = vld [vmem:[%s303 + $0x98] sm:$0xff]
        %v329 = vld [vmem:[%s303 + $0xa0] sm:$0xff]
        %v330 = vld [vmem:[%s303 + $0xa8] sm:$0xff]
        %v331 = vld [vmem:[%s303 + $0xb0] sm:$0xff]
        %v332 = vld [vmem:[%s303 + $0xb8] sm:$0xff]
        %v333 = vld [vmem:[%s303 + $0xc0] sm:$0xff]
        %v334 = vld [vmem:[%s303 + $0xc8] sm:$0xff]
        %v335 = vld [vmem:[%s303 + $0xd0] sm:$0xff]
        %v336 = vld [vmem:[%s303 + $0xd8] sm:$0xff]
        %v337 = vld [vmem:[%s303 + $0xe0] sm:$0xff]
        %v338 = vld [vmem:[%s303 + $0xe8] sm:$0xff]
        %v339 = vld [vmem:[%s303 + $0xf0] sm:$0xff]
        %v340 = vld [vmem:[%s303 + $0xf8] sm:$0xff]
        %v341 = vld [vmem:[%s2] sm:$0xff]
        %v342 = vld [vmem:[%s2 + $0x8] sm:$0xff]
        %v343 = vld [vmem:[%s2 + $0x10] sm:$0xff]
        %v344 = vld [vmem:[%s2 + $0x18] sm:$0xff]
        %v345 = vld [vmem:[%s2 + $0x20] sm:$0xff]
        %v346 = vld [vmem:[%s2 + $0x28] sm:$0xff]
        %v347 = vld [vmem:[%s2 + $0x30] sm:$0xff]
        %v348 = vld [vmem:[%s2 + $0x38] sm:$0xff]
        %v349 = vld [vmem:[%s2 + $0x40] sm:$0xff]
        %v350 = vld [vmem:[%s2 + $0x48] sm:$0xff]
        %v351 = vld [vmem:[%s2 + $0x50] sm:$0xff]
        %v352 = vld [vmem:[%s2 + $0x58] sm:$0xff]
        %v353 = vld [vmem:[%s2 + $0x60] sm:$0xff]
        %v354 = vld [vmem:[%s2 + $0x68] sm:$0xff]
        %v355 = vld [vmem:[%s2 + $0x70] sm:$0xff]
        %v356 = vld [vmem:[%s2 + $0x78] sm:$0xff]
        %v357 = vld [vmem:[%s2 + $0x80] sm:$0xff]
        %v358 = vld [vmem:[%s2 + $0x88] sm:$0xff]
        %v359 = vld [vmem:[%s2 + $0x90] sm:$0xff]
        %v360 = vld [vmem:[%s2 + $0x98] sm:$0xff]
        %v361 = vld [vmem:[%s2 + $0xa0] sm:$0xff]
        %v362 = vld [vmem:[%s2 + $0xa8] sm:$0xff]
        %v363 = vld [vmem:[%s2 + $0xb0] sm:$0xff]
        %v364 = vld [vmem:[%s2 + $0xb8] sm:$0xff]
        %v365 = vld [vmem:[%s2 + $0xc0] sm:$0xff]
        %v366 = vld [vmem:[%s2 + $0xc8] sm:$0xff]
        %v367 = vld [vmem:[%s2 + $0xd0] sm:$0xff]
        %v368 = vld [vmem:[%s2 + $0xd8] sm:$0xff]
        %v369 = vld [vmem:[%s2 + $0xe0] sm:$0xff]
        %v370 = vld [vmem:[%s2 + $0xe8] sm:$0xff]
        %v371 = vld [vmem:[%s2 + $0xf0] sm:$0xff]
        %v372 = vld [vmem:[%s2 + $0xf8] sm:$0xff]
        %v373 = vld [vmem:[%s307] sm:$0x1]
        %375 = vset.pattern.permute.xlu0 0
        %376 = vperm.xlu0 %375, %v341
        %v377 = vpop.permute.xlu0 %376
        %380 = vset.pattern.permute.xlu0 0
        %381 = vperm.xlu0 %380, %v342
        %v382 = vpop.permute.xlu0 %381
        %385 = vset.pattern.permute.xlu0 0
        %386 = vperm.xlu0 %385, %v343
        %v387 = vpop.permute.xlu0 %386
        %390 = vset.pattern.permute.xlu0 0
        %391 = vperm.xlu0 %390, %v344
        %v392 = vpop.permute.xlu0 %391
        %395 = vset.pattern.permute.xlu0 0
        %396 = vperm.xlu0 %395, %v345
        %v397 = vpop.permute.xlu0 %396
        %400 = vset.pattern.permute.xlu0 0
        %401 = vperm.xlu0 %400, %v346
        %v402 = vpop.permute.xlu0 %401
        %405 = vset.pattern.permute.xlu0 0
        %406 = vperm.xlu0 %405, %v347
        %v407 = vpop.permute.xlu0 %406
        %410 = vset.pattern.permute.xlu0 0
        %411 = vperm.xlu0 %410, %v348
        %v412 = vpop.permute.xlu0 %411
        %415 = vset.pattern.permute.xlu0 0
        %416 = vperm.xlu0 %415, %v349
        %v417 = vpop.permute.xlu0 %416
        %420 = vset.pattern.permute.xlu0 0
        %421 = vperm.xlu0 %420, %v350
        %v422 = vpop.permute.xlu0 %421
        %425 = vset.pattern.permute.xlu0 0
        %426 = vperm.xlu0 %425, %v351
        %v427 = vpop.permute.xlu0 %426
        %430 = vset.pattern.permute.xlu0 0
        %431 = vperm.xlu0 %430, %v352
        %v432 = vpop.permute.xlu0 %431
        %435 = vset.pattern.permute.xlu0 0
        %436 = vperm.xlu0 %435, %v353
        %v437 = vpop.permute.xlu0 %436
        %440 = vset.pattern.permute.xlu0 0
        %441 = vperm.xlu0 %440, %v354
        %v442 = vpop.permute.xlu0 %441
        %445 = vset.pattern.permute.xlu0 0
        %446 = vperm.xlu0 %445, %v355
        %v447 = vpop.permute.xlu0 %446
        %450 = vset.pattern.permute.xlu0 0
        %451 = vperm.xlu0 %450, %v356
        %v452 = vpop.permute.xlu0 %451
        %455 = vset.pattern.permute.xlu0 0
        %456 = vperm.xlu0 %455, %v357
        %v457 = vpop.permute.xlu0 %456
        %460 = vset.pattern.permute.xlu0 0
        %461 = vperm.xlu0 %460, %v358
        %v462 = vpop.permute.xlu0 %461
        %465 = vset.pattern.permute.xlu0 0
        %466 = vperm.xlu0 %465, %v359
        %v467 = vpop.permute.xlu0 %466
        %470 = vset.pattern.permute.xlu0 0
        %471 = vperm.xlu0 %470, %v360
        %v472 = vpop.permute.xlu0 %471
        %475 = vset.pattern.permute.xlu0 0
        %476 = vperm.xlu0 %475, %v361
        %v477 = vpop.permute.xlu0 %476
        %480 = vset.pattern.permute.xlu0 0
        %481 = vperm.xlu0 %480, %v362
        %v482 = vpop.permute.xlu0 %481
        %485 = vset.pattern.permute.xlu0 0
        %486 = vperm.xlu0 %485, %v363
        %v487 = vpop.permute.xlu0 %486
        %490 = vset.pattern.permute.xlu0 0
        %491 = vperm.xlu0 %490, %v364
        %v492 = vpop.permute.xlu0 %491
        %495 = vset.pattern.permute.xlu0 0
        %496 = vperm.xlu0 %495, %v365
        %v497 = vpop.permute.xlu0 %496
        %500 = vset.pattern.permute.xlu0 0
        %501 = vperm.xlu0 %500, %v366
        %v502 = vpop.permute.xlu0 %501
        %505 = vset.pattern.permute.xlu0 0
        %506 = vperm.xlu0 %505, %v367
        %v507 = vpop.permute.xlu0 %506
        %510 = vset.pattern.permute.xlu0 0
        %511 = vperm.xlu0 %510, %v368
        %v512 = vpop.permute.xlu0 %511
        %515 = vset.pattern.permute.xlu0 0
        %516 = vperm.xlu0 %515, %v369
        %v517 = vpop.permute.xlu0 %516
        %520 = vset.pattern.permute.xlu0 0
        %521 = vperm.xlu0 %520, %v370
        %v522 = vpop.permute.xlu0 %521
        %525 = vset.pattern.permute.xlu0 0
        %526 = vperm.xlu0 %525, %v371
        %v527 = vpop.permute.xlu0 %526
        %530 = vset.pattern.permute.xlu0 0
        %531 = vperm.xlu0 %530, %v372
        %v532 = vpop.permute.xlu0 %531
        %v534 = vlaneseq
        %v535 = vshrl.u32 %v534, 7
        %v536 = vsub.s32 0, %v535
        %v537 = vrot.slane %v373, %v536
        %v538 = vmul.f32 %v377, %v537
        %v539 = vmul.f32 %v382, %v537
        %v540 = vmul.f32 %v387, %v537
        %v541 = vmul.f32 %v392, %v537
        %v542 = vmul.f32 %v397, %v537
        %v543 = vmul.f32 %v402, %v537
        %v544 = vmul.f32 %v407, %v537
        %v545 = vmul.f32 %v412, %v537
        %v546 = vmul.f32 %v417, %v537
        %v547 = vmul.f32 %v422, %v537
        %v548 = vmul.f32 %v427, %v537
        %v549 = vmul.f32 %v432, %v537
        %v550 = vmul.f32 %v437, %v537
        %v551 = vmul.f32 %v442, %v537
        %v552 = vmul.f32 %v447, %v537
        %v553 = vmul.f32 %v452, %v537
        %v554 = vmul.f32 %v457, %v537
        %v555 = vmul.f32 %v462, %v537
        %v556 = vmul.f32 %v467, %v537
        %v557 = vmul.f32 %v472, %v537
        %v558 = vmul.f32 %v477, %v537
        %v559 = vmul.f32 %v482, %v537
        %v560 = vmul.f32 %v487, %v537
        %v561 = vmul.f32 %v492, %v537
        %v562 = vmul.f32 %v497, %v537
        %v563 = vmul.f32 %v502, %v537
        %v564 = vmul.f32 %v507, %v537
        %v565 = vmul.f32 %v512, %v537
        %v566 = vmul.f32 %v517, %v537
        %v567 = vmul.f32 %v522, %v537
        %v568 = vmul.f32 %v527, %v537
        %v569 = vmul.f32 %v532, %v537
        %571 = vset.pattern.permute.xlu0 0
        %572 = vperm.xlu0 %571, %v309
        %v573 = vpop.permute.xlu0 %572
        %576 = vset.pattern.permute.xlu0 0
        %577 = vperm.xlu0 %576, %v310
        %v578 = vpop.permute.xlu0 %577
        %581 = vset.pattern.permute.xlu0 0
        %582 = vperm.xlu0 %581, %v311
        %v583 = vpop.permute.xlu0 %582
        %586 = vset.pattern.permute.xlu0 0
        %587 = vperm.xlu0 %586, %v312
        %v588 = vpop.permute.xlu0 %587
        %591 = vset.pattern.permute.xlu0 0
        %592 = vperm.xlu0 %591, %v313
        %v593 = vpop.permute.xlu0 %592
        %596 = vset.pattern.permute.xlu0 0
        %597 = vperm.xlu0 %596, %v314
        %v598 = vpop.permute.xlu0 %597
        %601 = vset.pattern.permute.xlu0 0
        %602 = vperm.xlu0 %601, %v315
        %v603 = vpop.permute.xlu0 %602
        %606 = vset.pattern.permute.xlu0 0
        %607 = vperm.xlu0 %606, %v316
        %v608 = vpop.permute.xlu0 %607
        %611 = vset.pattern.permute.xlu0 0
        %612 = vperm.xlu0 %611, %v317
        %v613 = vpop.permute.xlu0 %612
        %616 = vset.pattern.permute.xlu0 0
        %617 = vperm.xlu0 %616, %v318
        %v618 = vpop.permute.xlu0 %617
        %621 = vset.pattern.permute.xlu0 0
        %622 = vperm.xlu0 %621, %v319
        %v623 = vpop.permute.xlu0 %622
        %626 = vset.pattern.permute.xlu0 0
        %627 = vperm.xlu0 %626, %v320
        %v628 = vpop.permute.xlu0 %627
        %631 = vset.pattern.permute.xlu0 0
        %632 = vperm.xlu0 %631, %v321
        %v633 = vpop.permute.xlu0 %632
        %636 = vset.pattern.permute.xlu0 0
        %637 = vperm.xlu0 %636, %v322
        %v638 = vpop.permute.xlu0 %637
        %641 = vset.pattern.permute.xlu0 0
        %642 = vperm.xlu0 %641, %v323
        %v643 = vpop.permute.xlu0 %642
        %646 = vset.pattern.permute.xlu0 0
        %647 = vperm.xlu0 %646, %v324
        %v648 = vpop.permute.xlu0 %647
        %651 = vset.pattern.permute.xlu0 0
        %652 = vperm.xlu0 %651, %v325
        %v653 = vpop.permute.xlu0 %652
        %656 = vset.pattern.permute.xlu0 0
        %657 = vperm.xlu0 %656, %v326
        %v658 = vpop.permute.xlu0 %657
        %661 = vset.pattern.permute.xlu0 0
        %662 = vperm.xlu0 %661, %v327
        %v663 = vpop.permute.xlu0 %662
        %666 = vset.pattern.permute.xlu0 0
        %667 = vperm.xlu0 %666, %v328
        %v668 = vpop.permute.xlu0 %667
        %671 = vset.pattern.permute.xlu0 0
        %672 = vperm.xlu0 %671, %v329
        %v673 = vpop.permute.xlu0 %672
        %676 = vset.pattern.permute.xlu0 0
        %677 = vperm.xlu0 %676, %v330
        %v678 = vpop.permute.xlu0 %677
        %681 = vset.pattern.permute.xlu0 0
        %682 = vperm.xlu0 %681, %v331
        %v683 = vpop.permute.xlu0 %682
        %686 = vset.pattern.permute.xlu0 0
        %687 = vperm.xlu0 %686, %v332
        %v688 = vpop.permute.xlu0 %687
        %691 = vset.pattern.permute.xlu0 0
        %692 = vperm.xlu0 %691, %v333
        %v693 = vpop.permute.xlu0 %692
        %696 = vset.pattern.permute.xlu0 0
        %697 = vperm.xlu0 %696, %v334
        %v698 = vpop.permute.xlu0 %697
        %701 = vset.pattern.permute.xlu0 0
        %702 = vperm.xlu0 %701, %v335
        %v703 = vpop.permute.xlu0 %702
        %706 = vset.pattern.permute.xlu0 0
        %707 = vperm.xlu0 %706, %v336
        %v708 = vpop.permute.xlu0 %707
        %711 = vset.pattern.permute.xlu0 0
        %712 = vperm.xlu0 %711, %v337
        %v713 = vpop.permute.xlu0 %712
        %716 = vset.pattern.permute.xlu0 0
        %717 = vperm.xlu0 %716, %v338
        %v718 = vpop.permute.xlu0 %717
        %721 = vset.pattern.permute.xlu0 0
        %722 = vperm.xlu0 %721, %v339
        %v723 = vpop.permute.xlu0 %722
        %726 = vset.pattern.permute.xlu0 0
        %727 = vperm.xlu0 %726, %v340
        %v728 = vpop.permute.xlu0 %727
        %v730 = vadd.f32 %v573, %v538
        %v731 = vadd.f32 %v578, %v539
        %v732 = vadd.f32 %v583, %v540
        %v733 = vadd.f32 %v588, %v541
        %v734 = vadd.f32 %v593, %v542
        %v735 = vadd.f32 %v598, %v543
        %v736 = vadd.f32 %v603, %v544
        %v737 = vadd.f32 %v608, %v545
        %v738 = vadd.f32 %v613, %v546
        %v739 = vadd.f32 %v618, %v547
        %v740 = vadd.f32 %v623, %v548
        %v741 = vadd.f32 %v628, %v549
        %v742 = vadd.f32 %v633, %v550
        %v743 = vadd.f32 %v638, %v551
        %v744 = vadd.f32 %v643, %v552
        %v745 = vadd.f32 %v648, %v553
        %v746 = vadd.f32 %v653, %v554
        %v747 = vadd.f32 %v658, %v555
        %v748 = vadd.f32 %v663, %v556
        %v749 = vadd.f32 %v668, %v557
        %v750 = vadd.f32 %v673, %v558
        %v751 = vadd.f32 %v678, %v559
        %v752 = vadd.f32 %v683, %v560
        %v753 = vadd.f32 %v688, %v561
        %v754 = vadd.f32 %v693, %v562
        %v755 = vadd.f32 %v698, %v563
        %v756 = vadd.f32 %v703, %v564
        %v757 = vadd.f32 %v708, %v565
        %v758 = vadd.f32 %v713, %v566
        %v759 = vadd.f32 %v718, %v567
        %v760 = vadd.f32 %v723, %v568
        %v761 = vadd.f32 %v728, %v569
        %v762 = vld [vmem:[%s307 + $0x1] sm:$0x1]
        %763 = vset.pattern.permute.xlu0 1
        %764 = vperm.xlu0 %763, %v341
        %v765 = vpop.permute.xlu0 %764
        %767 = vset.pattern.permute.xlu0 1
        %768 = vperm.xlu0 %767, %v342
        %v769 = vpop.permute.xlu0 %768
        %771 = vset.pattern.permute.xlu0 1
        %772 = vperm.xlu0 %771, %v343
        %v773 = vpop.permute.xlu0 %772
        %775 = vset.pattern.permute.xlu0 1
        %776 = vperm.xlu0 %775, %v344
        %v777 = vpop.permute.xlu0 %776
        %779 = vset.pattern.permute.xlu0 1
        %780 = vperm.xlu0 %779, %v345
        %v781 = vpop.permute.xlu0 %780
        %783 = vset.pattern.permute.xlu0 1
        %784 = vperm.xlu0 %783, %v346
        %v785 = vpop.permute.xlu0 %784
        %787 = vset.pattern.permute.xlu0 1
        %788 = vperm.xlu0 %787, %v347
        %v789 = vpop.permute.xlu0 %788
        %791 = vset.pattern.permute.xlu0 1
        %792 = vperm.xlu0 %791, %v348
        %v793 = vpop.permute.xlu0 %792
        %795 = vset.pattern.permute.xlu0 1
        %796 = vperm.xlu0 %795, %v349
        %v797 = vpop.permute.xlu0 %796
        %799 = vset.pattern.permute.xlu0 1
        %800 = vperm.xlu0 %799, %v350
        %v801 = vpop.permute.xlu0 %800
        %803 = vset.pattern.permute.xlu0 1
        %804 = vperm.xlu0 %803, %v351
        %v805 = vpop.permute.xlu0 %804
        %807 = vset.pattern.permute.xlu0 1
        %808 = vperm.xlu0 %807, %v352
        %v809 = vpop.permute.xlu0 %808
        %811 = vset.pattern.permute.xlu0 1
        %812 = vperm.xlu0 %811, %v353
        %v813 = vpop.permute.xlu0 %812
        %815 = vset.pattern.permute.xlu0 1
        %816 = vperm.xlu0 %815, %v354
        %v817 = vpop.permute.xlu0 %816
        %819 = vset.pattern.permute.xlu0 1
        %820 = vperm.xlu0 %819, %v355
        %v821 = vpop.permute.xlu0 %820
        %823 = vset.pattern.permute.xlu0 1
        %824 = vperm.xlu0 %823, %v356
        %v825 = vpop.permute.xlu0 %824
        %827 = vset.pattern.permute.xlu0 1
        %828 = vperm.xlu0 %827, %v357
        %v829 = vpop.permute.xlu0 %828
        %831 = vset.pattern.permute.xlu0 1
        %832 = vperm.xlu0 %831, %v358
        %v833 = vpop.permute.xlu0 %832
        %835 = vset.pattern.permute.xlu0 1
        %836 = vperm.xlu0 %835, %v359
        %v837 = vpop.permute.xlu0 %836
        %839 = vset.pattern.permute.xlu0 1
        %840 = vperm.xlu0 %839, %v360
        %v841 = vpop.permute.xlu0 %840
        %843 = vset.pattern.permute.xlu0 1
        %844 = vperm.xlu0 %843, %v361
        %v845 = vpop.permute.xlu0 %844
        %847 = vset.pattern.permute.xlu0 1
        %848 = vperm.xlu0 %847, %v362
        %v849 = vpop.permute.xlu0 %848
        %851 = vset.pattern.permute.xlu0 1
        %852 = vperm.xlu0 %851, %v363
        %v853 = vpop.permute.xlu0 %852
        %855 = vset.pattern.permute.xlu0 1
        %856 = vperm.xlu0 %855, %v364
        %v857 = vpop.permute.xlu0 %856
        %859 = vset.pattern.permute.xlu0 1
        %860 = vperm.xlu0 %859, %v365
        %v861 = vpop.permute.xlu0 %860
        %863 = vset.pattern.permute.xlu0 1
        %864 = vperm.xlu0 %863, %v366
        %v865 = vpop.permute.xlu0 %864
        %867 = vset.pattern.permute.xlu0 1
        %868 = vperm.xlu0 %867, %v367
        %v869 = vpop.permute.xlu0 %868
        %871 = vset.pattern.permute.xlu0 1
        %872 = vperm.xlu0 %871, %v368
        %v873 = vpop.permute.xlu0 %872
        %875 = vset.pattern.permute.xlu0 1
        %876 = vperm.xlu0 %875, %v369
        %v877 = vpop.permute.xlu0 %876
        %879 = vset.pattern.permute.xlu0 1
        %880 = vperm.xlu0 %879, %v370
        %v881 = vpop.permute.xlu0 %880
        %883 = vset.pattern.permute.xlu0 1
        %884 = vperm.xlu0 %883, %v371
        %v885 = vpop.permute.xlu0 %884
        %887 = vset.pattern.permute.xlu0 1
        %888 = vperm.xlu0 %887, %v372
        %v889 = vpop.permute.xlu0 %888
        %v891 = vlaneseq
        %v892 = vshrl.u32 %v891, 7
        %v893 = vsub.s32 0, %v892
        %v894 = vrot.slane %v762, %v893
        %v895 = vmul.f32 %v765, %v894
        %v896 = vmul.f32 %v769, %v894
        %v897 = vmul.f32 %v773, %v894
        %v898 = vmul.f32 %v777, %v894
        %v899 = vmul.f32 %v781, %v894
        %v900 = vmul.f32 %v785, %v894
        %v901 = vmul.f32 %v789, %v894
        %v902 = vmul.f32 %v793, %v894
        %v903 = vmul.f32 %v797, %v894
        %v904 = vmul.f32 %v801, %v894
        %v905 = vmul.f32 %v805, %v894
        %v906 = vmul.f32 %v809, %v894
        %v907 = vmul.f32 %v813, %v894
        %v908 = vmul.f32 %v817, %v894
        %v909 = vmul.f32 %v821, %v894
        %v910 = vmul.f32 %v825, %v894
        %v911 = vmul.f32 %v829, %v894
        %v912 = vmul.f32 %v833, %v894
        %v913 = vmul.f32 %v837, %v894
        %v914 = vmul.f32 %v841, %v894
        %v915 = vmul.f32 %v845, %v894
        %v916 = vmul.f32 %v849, %v894
        %v917 = vmul.f32 %v853, %v894
        %v918 = vmul.f32 %v857, %v894
        %v919 = vmul.f32 %v861, %v894
        %v920 = vmul.f32 %v865, %v894
        %v921 = vmul.f32 %v869, %v894
        %v922 = vmul.f32 %v873, %v894
        %v923 = vmul.f32 %v877, %v894
        %v924 = vmul.f32 %v881, %v894
        %v925 = vmul.f32 %v885, %v894
        %v926 = vmul.f32 %v889, %v894
        %v927 = vadd.f32 %v730, %v895
        %v928 = vadd.f32 %v731, %v896
        %v929 = vadd.f32 %v732, %v897
        %v930 = vadd.f32 %v733, %v898
        %v931 = vadd.f32 %v734, %v899
        %v932 = vadd.f32 %v735, %v900
        %v933 = vadd.f32 %v736, %v901
        %v934 = vadd.f32 %v737, %v902
        %v935 = vadd.f32 %v738, %v903
        %v936 = vadd.f32 %v739, %v904
        %v937 = vadd.f32 %v740, %v905
        %v938 = vadd.f32 %v741, %v906
        %v939 = vadd.f32 %v742, %v907
        %v940 = vadd.f32 %v743, %v908
        %v941 = vadd.f32 %v744, %v909
        %v942 = vadd.f32 %v745, %v910
        %v943 = vadd.f32 %v746, %v911
        %v944 = vadd.f32 %v747, %v912
        %v945 = vadd.f32 %v748, %v913
        %v946 = vadd.f32 %v749, %v914
        %v947 = vadd.f32 %v750, %v915
        %v948 = vadd.f32 %v751, %v916
        %v949 = vadd.f32 %v752, %v917
        %v950 = vadd.f32 %v753, %v918
        %v951 = vadd.f32 %v754, %v919
        %v952 = vadd.f32 %v755, %v920
        %v953 = vadd.f32 %v756, %v921
        %v954 = vadd.f32 %v757, %v922
        %v955 = vadd.f32 %v758, %v923
        %v956 = vadd.f32 %v759, %v924
        %v957 = vadd.f32 %v760, %v925
        %v958 = vadd.f32 %v761, %v926
        %v959 = vmax.f32 %v927, 0.0
        %v960 = vmax.f32 %v928, 0.0
        %v961 = vmax.f32 %v929, 0.0
        %v962 = vmax.f32 %v930, 0.0
        %v963 = vmax.f32 %v931, 0.0
        %v964 = vmax.f32 %v932, 0.0
        %v965 = vmax.f32 %v933, 0.0
        %v966 = vmax.f32 %v934, 0.0
        %v967 = vmax.f32 %v935, 0.0
        %v968 = vmax.f32 %v936, 0.0
        %v969 = vmax.f32 %v937, 0.0
        %v970 = vmax.f32 %v938, 0.0
        %v971 = vmax.f32 %v939, 0.0
        %v972 = vmax.f32 %v940, 0.0
        %v973 = vmax.f32 %v941, 0.0
        %v974 = vmax.f32 %v942, 0.0
        %v975 = vmax.f32 %v943, 0.0
        %v976 = vmax.f32 %v944, 0.0
        %v977 = vmax.f32 %v945, 0.0
        %v978 = vmax.f32 %v946, 0.0
        %v979 = vmax.f32 %v947, 0.0
        %v980 = vmax.f32 %v948, 0.0
        %v981 = vmax.f32 %v949, 0.0
        %v982 = vmax.f32 %v950, 0.0
        %v983 = vmax.f32 %v951, 0.0
        %v984 = vmax.f32 %v952, 0.0
        %v985 = vmax.f32 %v953, 0.0
        %v986 = vmax.f32 %v954, 0.0
        %v987 = vmax.f32 %v955, 0.0
        %v988 = vmax.f32 %v956, 0.0
        %v989 = vmax.f32 %v957, 0.0
        %v990 = vmax.f32 %v958, 0.0
        %v991 = vpack.c.bf16 %v960, %v959
        %v992 = vpack.c.bf16 %v962, %v961
        %v993 = vpack.c.bf16 %v964, %v963
        %v994 = vpack.c.bf16 %v966, %v965
        %v995 = vpack.c.bf16 %v968, %v967
        %v996 = vpack.c.bf16 %v970, %v969
        %v997 = vpack.c.bf16 %v972, %v971
        %v998 = vpack.c.bf16 %v974, %v973
        %v999 = vpack.c.bf16 %v976, %v975
        %v1000 = vpack.c.bf16 %v978, %v977
        %v1001 = vpack.c.bf16 %v980, %v979
        %v1002 = vpack.c.bf16 %v982, %v981
        %v1003 = vpack.c.bf16 %v984, %v983
        %v1004 = vpack.c.bf16 %v986, %v985
        %v1005 = vpack.c.bf16 %v988, %v987
        %v1006 = vpack.c.bf16 %v990, %v989
        %v1007 = vld [vmem:[%s3] sm:$0xff]
        %v1008 = vld [vmem:[%s3 + $0x8] sm:$0xff]
        %v1009 = vld [vmem:[%s3 + $0x10] sm:$0xff]
        %v1010 = vld [vmem:[%s3 + $0x18] sm:$0xff]
        %v1011 = vld [vmem:[%s3 + $0x20] sm:$0xff]
        %v1012 = vld [vmem:[%s3 + $0x28] sm:$0xff]
        %v1013 = vld [vmem:[%s3 + $0x30] sm:$0xff]
        %v1014 = vld [vmem:[%s3 + $0x38] sm:$0xff]
        %v1015 = vld [vmem:[%s3 + $0x40] sm:$0xff]
        %v1016 = vld [vmem:[%s3 + $0x48] sm:$0xff]
        %v1017 = vld [vmem:[%s3 + $0x50] sm:$0xff]
        %v1018 = vld [vmem:[%s3 + $0x58] sm:$0xff]
        %v1019 = vld [vmem:[%s3 + $0x60] sm:$0xff]
        %v1020 = vld [vmem:[%s3 + $0x68] sm:$0xff]
        %v1021 = vld [vmem:[%s3 + $0x70] sm:$0xff]
        %v1022 = vld [vmem:[%s3 + $0x78] sm:$0xff]
        %v1023 = vld [vmem:[%s3 + $0x80] sm:$0xff]
        %v1024 = vld [vmem:[%s3 + $0x88] sm:$0xff]
        %v1025 = vld [vmem:[%s3 + $0x90] sm:$0xff]
        %v1026 = vld [vmem:[%s3 + $0x98] sm:$0xff]
        %v1027 = vld [vmem:[%s3 + $0xa0] sm:$0xff]
        %v1028 = vld [vmem:[%s3 + $0xa8] sm:$0xff]
        %v1029 = vld [vmem:[%s3 + $0xb0] sm:$0xff]
        %v1030 = vld [vmem:[%s3 + $0xb8] sm:$0xff]
        %v1031 = vld [vmem:[%s3 + $0xc0] sm:$0xff]
        %v1032 = vld [vmem:[%s3 + $0xc8] sm:$0xff]
        %v1033 = vld [vmem:[%s3 + $0xd0] sm:$0xff]
        %v1034 = vld [vmem:[%s3 + $0xd8] sm:$0xff]
        %v1035 = vld [vmem:[%s3 + $0xe0] sm:$0xff]
        %v1036 = vld [vmem:[%s3 + $0xe8] sm:$0xff]
        %v1037 = vld [vmem:[%s3 + $0xf0] sm:$0xff]
        %v1038 = vld [vmem:[%s3 + $0xf8] sm:$0xff]
        %v1039 = vld [vmem:[%s4] sm:$0xff]
        %v1040 = vld [vmem:[%s4 + $0x8] sm:$0xff]
        %v1041 = vld [vmem:[%s4 + $0x10] sm:$0xff]
        %v1042 = vld [vmem:[%s4 + $0x18] sm:$0xff]
        %v1043 = vld [vmem:[%s4 + $0x20] sm:$0xff]
        %v1044 = vld [vmem:[%s4 + $0x28] sm:$0xff]
        %v1045 = vld [vmem:[%s4 + $0x30] sm:$0xff]
        %v1046 = vld [vmem:[%s4 + $0x38] sm:$0xff]
        %v1047 = vld [vmem:[%s4 + $0x40] sm:$0xff]
        %v1048 = vld [vmem:[%s4 + $0x48] sm:$0xff]
        %v1049 = vld [vmem:[%s4 + $0x50] sm:$0xff]
        %v1050 = vld [vmem:[%s4 + $0x58] sm:$0xff]
        %v1051 = vld [vmem:[%s4 + $0x60] sm:$0xff]
        %v1052 = vld [vmem:[%s4 + $0x68] sm:$0xff]
        %v1053 = vld [vmem:[%s4 + $0x70] sm:$0xff]
        %v1054 = vld [vmem:[%s4 + $0x78] sm:$0xff]
        %v1055 = vld [vmem:[%s4 + $0x80] sm:$0xff]
        %v1056 = vld [vmem:[%s4 + $0x88] sm:$0xff]
        %v1057 = vld [vmem:[%s4 + $0x90] sm:$0xff]
        %v1058 = vld [vmem:[%s4 + $0x98] sm:$0xff]
        %v1059 = vld [vmem:[%s4 + $0xa0] sm:$0xff]
        %v1060 = vld [vmem:[%s4 + $0xa8] sm:$0xff]
        %v1061 = vld [vmem:[%s4 + $0xb0] sm:$0xff]
        %v1062 = vld [vmem:[%s4 + $0xb8] sm:$0xff]
        %v1063 = vld [vmem:[%s4 + $0xc0] sm:$0xff]
        %v1064 = vld [vmem:[%s4 + $0xc8] sm:$0xff]
        %v1065 = vld [vmem:[%s4 + $0xd0] sm:$0xff]
        %v1066 = vld [vmem:[%s4 + $0xd8] sm:$0xff]
        %v1067 = vld [vmem:[%s4 + $0xe0] sm:$0xff]
        %v1068 = vld [vmem:[%s4 + $0xe8] sm:$0xff]
        %v1069 = vld [vmem:[%s4 + $0xf0] sm:$0xff]
        %v1070 = vld [vmem:[%s4 + $0xf8] sm:$0xff]
        %1072 = vset.pattern.permute.xlu0 0
        %1073 = vperm.xlu0 %1072, %v1039
        %v1074 = vpop.permute.xlu0 %1073
        %1077 = vset.pattern.permute.xlu0 0
        %1078 = vperm.xlu0 %1077, %v1040
        %v1079 = vpop.permute.xlu0 %1078
        %1082 = vset.pattern.permute.xlu0 0
        %1083 = vperm.xlu0 %1082, %v1041
        %v1084 = vpop.permute.xlu0 %1083
        %1087 = vset.pattern.permute.xlu0 0
        %1088 = vperm.xlu0 %1087, %v1042
        %v1089 = vpop.permute.xlu0 %1088
        %1092 = vset.pattern.permute.xlu0 0
        %1093 = vperm.xlu0 %1092, %v1043
        %v1094 = vpop.permute.xlu0 %1093
        %1097 = vset.pattern.permute.xlu0 0
        %1098 = vperm.xlu0 %1097, %v1044
        %v1099 = vpop.permute.xlu0 %1098
        %1102 = vset.pattern.permute.xlu0 0
        %1103 = vperm.xlu0 %1102, %v1045
        %v1104 = vpop.permute.xlu0 %1103
        %1107 = vset.pattern.permute.xlu0 0
        %1108 = vperm.xlu0 %1107, %v1046
        %v1109 = vpop.permute.xlu0 %1108
        %1112 = vset.pattern.permute.xlu0 0
        %1113 = vperm.xlu0 %1112, %v1047
        %v1114 = vpop.permute.xlu0 %1113
        %1117 = vset.pattern.permute.xlu0 0
        %1118 = vperm.xlu0 %1117, %v1048
        %v1119 = vpop.permute.xlu0 %1118
        %1122 = vset.pattern.permute.xlu0 0
        %1123 = vperm.xlu0 %1122, %v1049
        %v1124 = vpop.permute.xlu0 %1123
        %1127 = vset.pattern.permute.xlu0 0
        %1128 = vperm.xlu0 %1127, %v1050
        %v1129 = vpop.permute.xlu0 %1128
        %1132 = vset.pattern.permute.xlu0 0
        %1133 = vperm.xlu0 %1132, %v1051
        %v1134 = vpop.permute.xlu0 %1133
        %1137 = vset.pattern.permute.xlu0 0
        %1138 = vperm.xlu0 %1137, %v1052
        %v1139 = vpop.permute.xlu0 %1138
        %1142 = vset.pattern.permute.xlu0 0
        %1143 = vperm.xlu0 %1142, %v1053
        %v1144 = vpop.permute.xlu0 %1143
        %1147 = vset.pattern.permute.xlu0 0
        %1148 = vperm.xlu0 %1147, %v1054
        %v1149 = vpop.permute.xlu0 %1148
        %1152 = vset.pattern.permute.xlu0 0
        %1153 = vperm.xlu0 %1152, %v1055
        %v1154 = vpop.permute.xlu0 %1153
        %1157 = vset.pattern.permute.xlu0 0
        %1158 = vperm.xlu0 %1157, %v1056
        %v1159 = vpop.permute.xlu0 %1158
        %1162 = vset.pattern.permute.xlu0 0
        %1163 = vperm.xlu0 %1162, %v1057
        %v1164 = vpop.permute.xlu0 %1163
        %1167 = vset.pattern.permute.xlu0 0
        %1168 = vperm.xlu0 %1167, %v1058
        %v1169 = vpop.permute.xlu0 %1168
        %1172 = vset.pattern.permute.xlu0 0
        %1173 = vperm.xlu0 %1172, %v1059
        %v1174 = vpop.permute.xlu0 %1173
        %1177 = vset.pattern.permute.xlu0 0
        %1178 = vperm.xlu0 %1177, %v1060
        %v1179 = vpop.permute.xlu0 %1178
        %1182 = vset.pattern.permute.xlu0 0
        %1183 = vperm.xlu0 %1182, %v1061
        %v1184 = vpop.permute.xlu0 %1183
        %1187 = vset.pattern.permute.xlu0 0
        %1188 = vperm.xlu0 %1187, %v1062
        %v1189 = vpop.permute.xlu0 %1188
        %1192 = vset.pattern.permute.xlu0 0
        %1193 = vperm.xlu0 %1192, %v1063
        %v1194 = vpop.permute.xlu0 %1193
        %1197 = vset.pattern.permute.xlu0 0
        %1198 = vperm.xlu0 %1197, %v1064
        %v1199 = vpop.permute.xlu0 %1198
        %1202 = vset.pattern.permute.xlu0 0
        %1203 = vperm.xlu0 %1202, %v1065
        %v1204 = vpop.permute.xlu0 %1203
        %1207 = vset.pattern.permute.xlu0 0
        %1208 = vperm.xlu0 %1207, %v1066
        %v1209 = vpop.permute.xlu0 %1208
        %1212 = vset.pattern.permute.xlu0 0
        %1213 = vperm.xlu0 %1212, %v1067
        %v1214 = vpop.permute.xlu0 %1213
        %1217 = vset.pattern.permute.xlu0 0
        %1218 = vperm.xlu0 %1217, %v1068
        %v1219 = vpop.permute.xlu0 %1218
        %1222 = vset.pattern.permute.xlu0 0
        %1223 = vperm.xlu0 %1222, %v1069
        %v1224 = vpop.permute.xlu0 %1223
        %1227 = vset.pattern.permute.xlu0 0
        %1228 = vperm.xlu0 %1227, %v1070
        %v1229 = vpop.permute.xlu0 %1228
        %v1263 = vunpack.c.l.b16 %v1007
        %v1264 = vunpack.c.h.b16 %v1007
        %v1265 = vunpack.c.l.b16 %v1008
        %v1266 = vunpack.c.h.b16 %v1008
        %v1267 = vunpack.c.l.b16 %v1009
        %v1268 = vunpack.c.h.b16 %v1009
        %v1269 = vunpack.c.l.b16 %v1010
        %v1270 = vunpack.c.h.b16 %v1010
        %v1271 = vunpack.c.l.b16 %v1011
        %v1272 = vunpack.c.h.b16 %v1011
        %v1273 = vunpack.c.l.b16 %v1012
        %v1274 = vunpack.c.h.b16 %v1012
        %v1275 = vunpack.c.l.b16 %v1013
        %v1276 = vunpack.c.h.b16 %v1013
        %v1277 = vunpack.c.l.b16 %v1014
        %v1278 = vunpack.c.h.b16 %v1014
        %v1279 = vunpack.c.l.b16 %v1015
        %v1280 = vunpack.c.h.b16 %v1015
        %v1281 = vunpack.c.l.b16 %v1016
        %v1282 = vunpack.c.h.b16 %v1016
        %v1283 = vunpack.c.l.b16 %v1017
        %v1284 = vunpack.c.h.b16 %v1017
        %v1285 = vunpack.c.l.b16 %v1018
        %v1286 = vunpack.c.h.b16 %v1018
        %v1287 = vunpack.c.l.b16 %v1019
        %v1288 = vunpack.c.h.b16 %v1019
        %v1289 = vunpack.c.l.b16 %v1020
        %v1290 = vunpack.c.h.b16 %v1020
        %v1291 = vunpack.c.l.b16 %v1021
        %v1292 = vunpack.c.h.b16 %v1021
        %v1293 = vunpack.c.l.b16 %v1022
        %v1294 = vunpack.c.h.b16 %v1022
        %v1295 = vunpack.c.l.b16 %v1023
        %v1296 = vunpack.c.h.b16 %v1023
        %v1297 = vunpack.c.l.b16 %v1024
        %v1298 = vunpack.c.h.b16 %v1024
        %v1299 = vunpack.c.l.b16 %v1025
        %v1300 = vunpack.c.h.b16 %v1025
        %v1301 = vunpack.c.l.b16 %v1026
        %v1302 = vunpack.c.h.b16 %v1026
        %v1303 = vunpack.c.l.b16 %v1027
        %v1304 = vunpack.c.h.b16 %v1027
        %v1305 = vunpack.c.l.b16 %v1028
        %v1306 = vunpack.c.h.b16 %v1028
        %v1307 = vunpack.c.l.b16 %v1029
        %v1308 = vunpack.c.h.b16 %v1029
        %v1309 = vunpack.c.l.b16 %v1030
        %v1310 = vunpack.c.h.b16 %v1030
        %v1311 = vunpack.c.l.b16 %v1031
        %v1312 = vunpack.c.h.b16 %v1031
        %v1313 = vunpack.c.l.b16 %v1032
        %v1314 = vunpack.c.h.b16 %v1032
        %v1315 = vunpack.c.l.b16 %v1033
        %v1316 = vunpack.c.h.b16 %v1033
        %v1317 = vunpack.c.l.b16 %v1034
        %v1318 = vunpack.c.h.b16 %v1034
        %v1319 = vunpack.c.l.b16 %v1035
        %v1320 = vunpack.c.h.b16 %v1035
        %v1321 = vunpack.c.l.b16 %v1036
        %v1322 = vunpack.c.h.b16 %v1036
        %v1323 = vunpack.c.l.b16 %v1037
        %v1324 = vunpack.c.h.b16 %v1037
        %v1325 = vunpack.c.l.b16 %v1038
        %v1326 = vunpack.c.h.b16 %v1038
        %v1327 = vpack.c.b16 %v1265, %v1263
        %v1328 = vpack.c.b16 %v1266, %v1264
        %v1329 = vpack.c.b16 %v1269, %v1267
        %v1330 = vpack.c.b16 %v1270, %v1268
        %v1331 = vpack.c.b16 %v1273, %v1271
        %v1332 = vpack.c.b16 %v1274, %v1272
        %v1333 = vpack.c.b16 %v1277, %v1275
        %v1334 = vpack.c.b16 %v1278, %v1276
        %v1335 = vpack.c.b16 %v1281, %v1279
        %v1336 = vpack.c.b16 %v1282, %v1280
        %v1337 = vpack.c.b16 %v1285, %v1283
        %v1338 = vpack.c.b16 %v1286, %v1284
        %v1339 = vpack.c.b16 %v1289, %v1287
        %v1340 = vpack.c.b16 %v1290, %v1288
        %v1341 = vpack.c.b16 %v1293, %v1291
        %v1342 = vpack.c.b16 %v1294, %v1292
        %v1343 = vpack.c.b16 %v1297, %v1295
        %v1344 = vpack.c.b16 %v1298, %v1296
        %v1345 = vpack.c.b16 %v1301, %v1299
        %v1346 = vpack.c.b16 %v1302, %v1300
        %v1347 = vpack.c.b16 %v1305, %v1303
        %v1348 = vpack.c.b16 %v1306, %v1304
        %v1349 = vpack.c.b16 %v1309, %v1307
        %v1350 = vpack.c.b16 %v1310, %v1308
        %v1351 = vpack.c.b16 %v1313, %v1311
        %v1352 = vpack.c.b16 %v1314, %v1312
        %v1353 = vpack.c.b16 %v1317, %v1315
        %v1354 = vpack.c.b16 %v1318, %v1316
        %v1355 = vpack.c.b16 %v1321, %v1319
        %v1356 = vpack.c.b16 %v1322, %v1320
        %v1357 = vpack.c.b16 %v1325, %v1323
        %v1358 = vpack.c.b16 %v1326, %v1324
        %1391 = vmatprep.subr.bf16.mxu0 0
        %1392 = vmatpush1.bf16.msra.mxu0 %v991
        %1393 = vmatprep.subr.bf16.mxu0 0
        %1394 = vmatpush1.bf16.msra.mxu0 %v992
        %1395 = vmatprep.subr.bf16.mxu0 0
        %1396 = vmatpush1.bf16.msra.mxu0 %v993
        %1397 = vmatprep.subr.bf16.mxu0 0
        %1398 = vmatpush1.bf16.msra.mxu0 %v994
        %1399 = vmatprep.subr.bf16.mxu0 0
        %1400 = vmatpush1.bf16.msra.mxu0 %v995
        %1401 = vmatprep.subr.bf16.mxu0 0
        %1402 = vmatpush1.bf16.msra.mxu0 %v996
        %1403 = vmatprep.subr.bf16.mxu0 0
        %1404 = vmatpush1.bf16.msra.mxu0 %v997
        %1405 = vmatprep.subr.bf16.mxu0 0
        %1406 = vmatpush1.bf16.msra.mxu0 %v998
        %1407 = vmatprep.subr.bf16.mxu0 0
        %1408 = vmatpush1.bf16.msra.mxu0 %v999
        %1409 = vmatprep.subr.bf16.mxu0 0
        %1410 = vmatpush1.bf16.msra.mxu0 %v1000
        %1411 = vmatprep.subr.bf16.mxu0 0
        %1412 = vmatpush1.bf16.msra.mxu0 %v1001
        %1413 = vmatprep.subr.bf16.mxu0 0
        %1414 = vmatpush1.bf16.msra.mxu0 %v1002
        %1415 = vmatprep.subr.bf16.mxu0 0
        %1416 = vmatpush1.bf16.msra.mxu0 %v1003
        %1417 = vmatprep.subr.bf16.mxu0 0
        %1418 = vmatpush1.bf16.msra.mxu0 %v1004
        %1419 = vmatprep.subr.bf16.mxu0 0
        %1420 = vmatpush1.bf16.msra.mxu0 %v1005
        %1421 = vmatprep.subr.bf16.mxu0 0
        %1422 = vmatpush1.bf16.msra.mxu0 %v1006
        %1423 = vmatprep.mubr.bf16.mxu0 %v1328
        %1424 = vmatmul.mubr.bf16.gmra.mrb[0].mxu0 %v1327
        %v1425 = vpop.f32.mrb[0].mxu0
        %v1426 = vadd.f32 %v1074, %v1425
        %v1427 = vpop.f32.mrb[0].mxu0
        %v1428 = vpop.f32.mrb[0].mxu0
        %v1429 = vadd.f32 %v1079, %v1428
        %v1430 = vpop.f32.mrb[0].mxu0
        %1431 = vmatprep.mubr.bf16.mxu0 %v1330
        %1432 = vmatmul.mubr.bf16.gmra.mrb[0].mxu0 %v1329
        %v1433 = vpop.f32.mrb[0].mxu0
        %v1434 = vadd.f32 %v1084, %v1433
        %v1435 = vpop.f32.mrb[0].mxu0
        %v1436 = vpop.f32.mrb[0].mxu0
        %v1437 = vadd.f32 %v1089, %v1436
        %v1438 = vpop.f32.mrb[0].mxu0
        %1439 = vmatprep.mubr.bf16.mxu0 %v1332
        %1440 = vmatmul.mubr.bf16.gmra.mrb[0].mxu0 %v1331
        %v1441 = vpop.f32.mrb[0].mxu0
        %v1442 = vadd.f32 %v1094, %v1441
        %v1443 = vpop.f32.mrb[0].mxu0
        %v1444 = vpop.f32.mrb[0].mxu0
        %v1445 = vadd.f32 %v1099, %v1444
        %v1446 = vpop.f32.mrb[0].mxu0
        %1447 = vmatprep.mubr.bf16.mxu0 %v1334
        %1448 = vmatmul.mubr.bf16.gmra.mrb[0].mxu0 %v1333
        %v1449 = vpop.f32.mrb[0].mxu0
        %v1450 = vadd.f32 %v1104, %v1449
        %v1451 = vpop.f32.mrb[0].mxu0
        %v1452 = vpop.f32.mrb[0].mxu0
        %v1453 = vadd.f32 %v1109, %v1452
        %v1454 = vpop.f32.mrb[0].mxu0
        %1455 = vmatprep.mubr.bf16.mxu0 %v1336
        %1456 = vmatmul.mubr.bf16.gmra.mrb[0].mxu0 %v1335
        %v1457 = vpop.f32.mrb[0].mxu0
        %v1458 = vadd.f32 %v1114, %v1457
        %v1459 = vpop.f32.mrb[0].mxu0
        %v1460 = vpop.f32.mrb[0].mxu0
        %v1461 = vadd.f32 %v1119, %v1460
        %v1462 = vpop.f32.mrb[0].mxu0
        %1463 = vmatprep.mubr.bf16.mxu0 %v1338
        %1464 = vmatmul.mubr.bf16.gmra.mrb[0].mxu0 %v1337
        %v1465 = vpop.f32.mrb[0].mxu0
        %v1466 = vadd.f32 %v1124, %v1465
        %v1467 = vpop.f32.mrb[0].mxu0
        %v1468 = vpop.f32.mrb[0].mxu0
        %v1469 = vadd.f32 %v1129, %v1468
        %v1470 = vpop.f32.mrb[0].mxu0
        %1471 = vmatprep.mubr.bf16.mxu0 %v1340
        %1472 = vmatmul.mubr.bf16.gmra.mrb[0].mxu0 %v1339
        %v1473 = vpop.f32.mrb[0].mxu0
        %v1474 = vadd.f32 %v1134, %v1473
        %v1475 = vpop.f32.mrb[0].mxu0
        %v1476 = vpop.f32.mrb[0].mxu0
        %v1477 = vadd.f32 %v1139, %v1476
        %v1478 = vpop.f32.mrb[0].mxu0
        %1479 = vmatprep.mubr.bf16.mxu0 %v1342
        %1480 = vmatmul.mubr.bf16.gmra.mrb[0].mxu0 %v1341
        %v1481 = vpop.f32.mrb[0].mxu0
        %v1482 = vadd.f32 %v1144, %v1481
        %v1483 = vpop.f32.mrb[0].mxu0
        %v1484 = vpop.f32.mrb[0].mxu0
        %v1485 = vadd.f32 %v1149, %v1484
        %v1486 = vpop.f32.mrb[0].mxu0
        %1487 = vmatprep.mubr.bf16.mxu0 %v1344
        %1488 = vmatmul.mubr.bf16.gmra.mrb[0].mxu0 %v1343
        %v1489 = vpop.f32.mrb[0].mxu0
        %v1490 = vadd.f32 %v1154, %v1489
        %v1491 = vpop.f32.mrb[0].mxu0
        %v1492 = vpop.f32.mrb[0].mxu0
        %v1493 = vadd.f32 %v1159, %v1492
        %v1494 = vpop.f32.mrb[0].mxu0
        %1495 = vmatprep.mubr.bf16.mxu0 %v1346
        %1496 = vmatmul.mubr.bf16.gmra.mrb[0].mxu0 %v1345
        %v1497 = vpop.f32.mrb[0].mxu0
        %v1498 = vadd.f32 %v1164, %v1497
        %v1499 = vpop.f32.mrb[0].mxu0
        %v1500 = vpop.f32.mrb[0].mxu0
        %v1501 = vadd.f32 %v1169, %v1500
        %v1502 = vpop.f32.mrb[0].mxu0
        %1503 = vmatprep.mubr.bf16.mxu0 %v1348
        %1504 = vmatmul.mubr.bf16.gmra.mrb[0].mxu0 %v1347
        %v1505 = vpop.f32.mrb[0].mxu0
        %v1506 = vadd.f32 %v1174, %v1505
        %v1507 = vpop.f32.mrb[0].mxu0
        %v1508 = vpop.f32.mrb[0].mxu0
        %v1509 = vadd.f32 %v1179, %v1508
        %v1510 = vpop.f32.mrb[0].mxu0
        %1511 = vmatprep.mubr.bf16.mxu0 %v1350
        %1512 = vmatmul.mubr.bf16.gmra.mrb[0].mxu0 %v1349
        %v1513 = vpop.f32.mrb[0].mxu0
        %v1514 = vadd.f32 %v1184, %v1513
        %v1515 = vpop.f32.mrb[0].mxu0
        %v1516 = vpop.f32.mrb[0].mxu0
        %v1517 = vadd.f32 %v1189, %v1516
        %v1518 = vpop.f32.mrb[0].mxu0
        %1519 = vmatprep.mubr.bf16.mxu0 %v1352
        %1520 = vmatmul.mubr.bf16.gmra.mrb[0].mxu0 %v1351
        %v1521 = vpop.f32.mrb[0].mxu0
        %v1522 = vadd.f32 %v1194, %v1521
        %v1523 = vpop.f32.mrb[0].mxu0
        %v1524 = vpop.f32.mrb[0].mxu0
        %v1525 = vadd.f32 %v1199, %v1524
        %v1526 = vpop.f32.mrb[0].mxu0
        %1527 = vmatprep.mubr.bf16.mxu0 %v1354
        %1528 = vmatmul.mubr.bf16.gmra.mrb[0].mxu0 %v1353
        %v1529 = vpop.f32.mrb[0].mxu0
        %v1530 = vadd.f32 %v1204, %v1529
        %v1531 = vpop.f32.mrb[0].mxu0
        %v1532 = vpop.f32.mrb[0].mxu0
        %v1533 = vadd.f32 %v1209, %v1532
        %v1534 = vpop.f32.mrb[0].mxu0
        %1535 = vmatprep.mubr.bf16.mxu0 %v1356
        %1536 = vmatmul.mubr.bf16.gmra.mrb[0].mxu0 %v1355
        %v1537 = vpop.f32.mrb[0].mxu0
        %v1538 = vadd.f32 %v1214, %v1537
        %v1539 = vpop.f32.mrb[0].mxu0
        %v1540 = vpop.f32.mrb[0].mxu0
        %v1541 = vadd.f32 %v1219, %v1540
        %v1542 = vpop.f32.mrb[0].mxu0
        %1543 = vmatprep.mubr.bf16.mxu0 %v1358
        %1544 = vmatmul.mubr.bf16.gmra.mrb[0].mxu0 %v1357
        %v1545 = vpop.f32.mrb[0].mxu0
        %v1546 = vadd.f32 %v1224, %v1545
        %v1547 = vpop.f32.mrb[0].mxu0
        %v1548 = vpop.f32.mrb[0].mxu0
        %v1549 = vadd.f32 %v1229, %v1548
        %v1550 = vpop.f32.mrb[0].mxu0
        %1551 = vdwg.mxu0
        %v1552 = vmax.f32 %v1426, 0.0
        %v1553 = vmax.f32 %v1429, 0.0
        %v1554 = vmax.f32 %v1434, 0.0
        %v1555 = vmax.f32 %v1437, 0.0
        %v1556 = vmax.f32 %v1442, 0.0
        %v1557 = vmax.f32 %v1445, 0.0
        %v1558 = vmax.f32 %v1450, 0.0
        %v1559 = vmax.f32 %v1453, 0.0
        %v1560 = vmax.f32 %v1458, 0.0
        %v1561 = vmax.f32 %v1461, 0.0
        %v1562 = vmax.f32 %v1466, 0.0
        %v1563 = vmax.f32 %v1469, 0.0
        %v1564 = vmax.f32 %v1474, 0.0
        %v1565 = vmax.f32 %v1477, 0.0
        %v1566 = vmax.f32 %v1482, 0.0
        %v1567 = vmax.f32 %v1485, 0.0
        %v1568 = vmax.f32 %v1490, 0.0
        %v1569 = vmax.f32 %v1493, 0.0
        %v1570 = vmax.f32 %v1498, 0.0
        %v1571 = vmax.f32 %v1501, 0.0
        %v1572 = vmax.f32 %v1506, 0.0
        %v1573 = vmax.f32 %v1509, 0.0
        %v1574 = vmax.f32 %v1514, 0.0
        %v1575 = vmax.f32 %v1517, 0.0
        %v1576 = vmax.f32 %v1522, 0.0
        %v1577 = vmax.f32 %v1525, 0.0
        %v1578 = vmax.f32 %v1530, 0.0
        %v1579 = vmax.f32 %v1533, 0.0
        %v1580 = vmax.f32 %v1538, 0.0
        %v1581 = vmax.f32 %v1541, 0.0
        %v1582 = vmax.f32 %v1546, 0.0
        %v1583 = vmax.f32 %v1549, 0.0
        %v1584 = vpack.c.bf16 %v1553, %v1552
        %v1585 = vpack.c.bf16 %v1555, %v1554
        %v1586 = vpack.c.bf16 %v1557, %v1556
        %v1587 = vpack.c.bf16 %v1559, %v1558
        %v1588 = vpack.c.bf16 %v1561, %v1560
        %v1589 = vpack.c.bf16 %v1563, %v1562
        %v1590 = vpack.c.bf16 %v1565, %v1564
        %v1591 = vpack.c.bf16 %v1567, %v1566
        %v1592 = vpack.c.bf16 %v1569, %v1568
        %v1593 = vpack.c.bf16 %v1571, %v1570
        %v1594 = vpack.c.bf16 %v1573, %v1572
        %v1595 = vpack.c.bf16 %v1575, %v1574
        %v1596 = vpack.c.bf16 %v1577, %v1576
        %v1597 = vpack.c.bf16 %v1579, %v1578
        %v1598 = vpack.c.bf16 %v1581, %v1580
        %v1599 = vpack.c.bf16 %v1583, %v1582
        %v1600 = vld [vmem:[%s5] sm:$0x3]
        %v1601 = vld [vmem:[%s6] sm:$0x3]
        %1603 = vset.pattern.permute.xlu0 0
        %1604 = vperm.xlu0 %1603, %v1601
        %v1605 = vpop.permute.xlu0 %1604
        %v1609 = vunpack.c.l.s4 1966171168
        %v1610 = vunpack.c.0.s8 %v1609
        %v1611 = vlaneseq
        %v1612 = vshrl.u32 %v1611, 7
        %v1613 = vsub.s32 %v1610, %v1612
        %v1614 = vrot.slane %v1600, %v1613
        %v1615 = vcombine.high %v1614, %v1614
        %v1617 = vunpack.c.l.s4 1966171168
        %v1618 = vunpack.c.0.s8 %v1617
        %v1619 = vlaneseq
        %v1620 = vshrl.u32 %v1619, 7
        %v1621 = vsub.s32 %v1618, %v1620
        %v1622 = vrot.slane %v1614, %v1621
        %v1624 = vunpack.c.l.s4 1966171168
        %v1625 = vunpack.c.0.s8 %v1624
        %v1626 = vlaneseq
        %v1627 = vshrl.u32 %v1626, 7
        %v1628 = vsub.s32 %v1625, %v1627
        %v1629 = vrot.slane %v1615, %v1628
        %1632 = vmatprep.subr.bf16.mxu0 0
        %1633 = vmatpush1.bf16.msra.mxu0 %v1584
        %1634 = vmatprep.subr.bf16.mxu0 0
        %1635 = vmatpush1.bf16.msra.mxu0 %v1585
        %1636 = vmatprep.subr.bf16.mxu0 0
        %1637 = vmatpush1.bf16.msra.mxu0 %v1586
        %1638 = vmatprep.subr.bf16.mxu0 0
        %1639 = vmatpush1.bf16.msra.mxu0 %v1587
        %1640 = vmatprep.subr.bf16.mxu0 0
        %1641 = vmatpush1.bf16.msra.mxu0 %v1588
        %1642 = vmatprep.subr.bf16.mxu0 0
        %1643 = vmatpush1.bf16.msra.mxu0 %v1589
        %1644 = vmatprep.subr.bf16.mxu0 0
        %1645 = vmatpush1.bf16.msra.mxu0 %v1590
        %1646 = vmatprep.subr.bf16.mxu0 0
        %1647 = vmatpush1.bf16.msra.mxu0 %v1591
        %1648 = vmatprep.subr.bf16.mxu0 0
        %1649 = vmatpush1.bf16.msra.mxu0 %v1592
        %1650 = vmatprep.subr.bf16.mxu0 0
        %1651 = vmatpush1.bf16.msra.mxu0 %v1593
        %1652 = vmatprep.subr.bf16.mxu0 0
        %1653 = vmatpush1.bf16.msra.mxu0 %v1594
        %1654 = vmatprep.subr.bf16.mxu0 0
        %1655 = vmatpush1.bf16.msra.mxu0 %v1595
        %1656 = vmatprep.subr.bf16.mxu0 0
        %1657 = vmatpush1.bf16.msra.mxu0 %v1596
        %1658 = vmatprep.subr.bf16.mxu0 0
        %1659 = vmatpush1.bf16.msra.mxu0 %v1597
        %1660 = vmatprep.subr.bf16.mxu0 0
        %1661 = vmatpush1.bf16.msra.mxu0 %v1598
        %1662 = vmatprep.subr.bf16.mxu0 0
        %1663 = vmatpush1.bf16.msra.mxu0 %v1599
        %1664 = vmatprep.mubr.bf16.mxu0 %v1629
        %1665 = vmatmul.mubr.bf16.gmra.mrb[0].mxu0 %v1622
        %v1666 = vpop.f32.mrb[0].mxu0
        %v1667 = vadd.f32 %v1605, %v1666
        %v1668 = vpop.f32.mrb[0].mxu0
        %v1669 = vpop.f32.mrb[0].mxu0
        %v1670 = vpop.f32.mrb[0].mxu0
        %1671 = vdwg.mxu0
        %1672 = vst [vmem:[%s298] sm:$0x3] %v1667
        %s1673 = sand.u32 %s200, 1
        %s1674 = scalar_lea.sflag [#allocation3], %s1673
        %s1675 = sand.u32 %s200, 1
        %s1676 = smul.addr %s1675, 2
        %s1677 = scalar_lea.vmem [#allocation2], %s1676
        // Predicated region
        $region49: #{tpu_custom_call.1} parent=47 // pred_check
          %p1678 = pneg %p210
        $region50: #{tpu_custom_call.1} parent=47 // pred_check_branch
          %1680 = sbr.rel (%p1678) target = $region52
        $region51: #{tpu_custom_call.1} parent=47 // pred_region
          %s1682 = ssub.s32 32, 32
          %1683 = vsyncadd %s1674, %s1682
          %s1684 = sadd.s32 %s25, %s26
          %s1685 = smul.addr %s1684, 32
          %s1686 = scalar_lea.hbm %s7, %s1685
          %s1688 = sshll.u32 %s1677, 4
          %s1689 = int_to_ptr.vmem [resolvable:$true] %s1688
          %1691 = dma.vmem_to_hbm [thread:$0]  %s1689, 32, %s1686, %s1674
        $region52: #{tpu_custom_call.1} parent=47 // pred_fallthru
          _
      $region48: #{tpu_custom_call.1} parent=5 // pred_fallthru
        _
      %p1692 = scmp.le.s32.totalorder 2, %s16
      // Predicated region
      $region53: #{tpu_custom_call.1} parent=5 // pred_check
        %p1693 = pneg %p1692
      $region54: #{tpu_custom_call.1} parent=5 // pred_check_branch
        %1695 = sbr.rel (%p1693) target = $region56
      $region55: #{tpu_custom_call.1} parent=5 // pred_region
        %s1696 = ssub.s32 %s16, 2
        // Predicated region
        $region57: #{tpu_custom_call.1} parent=55 // pred_check
          %p1697 = pneg %p216
        $region58: #{tpu_custom_call.1} parent=55 // pred_check_branch
          %1699 = sbr.rel (%p1697) target = $region60
        $region59: #{tpu_custom_call.1} parent=55 // pred_region
          %s1700 = sand.u32 %s201, 1
          %s1701 = scalar_lea.sflag [#allocation3], %s1700
          %s1702 = sand.u32 %s201, 1
          %s1703 = smul.addr %s1702, 2
          %s1704 = scalar_lea.vmem [#allocation2], %s1703
          %1705 = dma.done %s1701, 32
        $region60: #{tpu_custom_call.1} parent=55 // pred_fallthru
          _
      $region56: #{tpu_custom_call.1} parent=5 // pred_fallthru
        _
    $region6: #{tpu_custom_call.1} parent=1 // loop_footer
      %s20 = sadd.s32 1, %s16
    $region7: #{tpu_custom_call.1} parent=1 // loop_footer_branch
      %15 = sbr.rel target = $region3
    $region8: #{tpu_custom_call.1} parent=1 // loop_exit
      _
    %1706 = vsyncpa [#allocation3], 1
    %s1707 = scalar_lea.sflag [#allocation3], 1
    %1708 = vsyncpa %s1707, 1

</llo_original>
